<compile_context>
chip_gen: v5e
topology: v5e:2x2
jax: 0.10.0
libtpu: 0.0.40
codegen_flags: <defaults>
</compile_context>

<pallas_src>
import jax
import jax.numpy as jnp
from jax import lax
from jax.experimental import pallas as pl
from jax.experimental.pallas import tpu as pltpu

B = 2            # batch
C = 32           # channels (divisible by 8 groups)
E = 16           # emb_dim
L = 128          # sequence length (power of two, lane aligned)
G = 8            # groups
CG = C // G
BL = B * L
EPS = 1e-5


def _silu(h):
    return h * jax.nn.sigmoid(h)


def _group_norm(h, gamma, beta, gmat, in_seq0):
    # h: (C, BL); gamma/beta: (C, 1); gmat: (C, C) group indicator; in_seq0: (C, BL) bool.
    inv_n = 1.0 / (CG * L)
    h0 = h[:, :L]            # aligned 128-lane slices, one per batch element
    h1 = h[:, L:]

    def seg_scale_shift(hseg):
        s = jnp.sum(hseg, axis=1, keepdims=True)                      # (C, 1)
        ss = jnp.sum(hseg * hseg, axis=1, keepdims=True)              # (C, 1)
        mean = jnp.dot(gmat, s, preferred_element_type=jnp.float32) * inv_n
        ex2 = jnp.dot(gmat, ss, preferred_element_type=jnp.float32) * inv_n
        var = jnp.maximum(ex2 - mean * mean, 0.0)
        scale = gamma * lax.rsqrt(var + EPS)                          # (C, 1)
        shift = beta - mean * scale                                   # (C, 1)
        return scale, shift

    sc0, sh0 = seg_scale_shift(h0)
    sc1, sh1 = seg_scale_shift(h1)
    scale = jnp.where(in_seq0, sc0, sc1)                              # (C, BL)
    shift = jnp.where(in_seq0, sh0, sh1)
    return h * scale + shift


def _conv3(h, wf, left_edge, right_edge):
    # Conv1d(C, C, k=3, padding=1) on (C, BL) as ONE (C, 3C) @ (3C, BL) matmul.
    # prev[i] = h[i-1] (zero at sequence start), nxt[i] = h[i+1] (zero at sequence end).
    prev = jnp.concatenate(
        [pltpu.roll(h[:, b * L:(b + 1) * L], shift=1, axis=1) for b in range(B)], axis=1)
    nxt = jnp.concatenate(
        [pltpu.roll(h[:, b * L:(b + 1) * L], shift=L - 1, axis=1) for b in range(B)], axis=1)
    prev = jnp.where(left_edge, 0.0, prev)
    nxt = jnp.where(right_edge, 0.0, nxt)
    hs = jnp.concatenate([prev, h, nxt], axis=0)                      # (3C, BL)
    return jnp.dot(wf, hs, preferred_element_type=jnp.float32)


def resblock_kernel(x_ref, add1_ref, gmat_ref,
                    g1_ref, b1_ref, w1_ref,
                    g2_ref, b2_ref, w2_ref, cb2_ref,
                    out_ref):
    x = x_ref[...]                                                    # (C, BL)
    gmat = gmat_ref[...]

    # Column masks (built once; single grid step).
    col = lax.broadcasted_iota(jnp.int32, (C, BL), 1)
    pos = jnp.bitwise_and(col, L - 1)                                 # col % L (L is 2^k)
    left_edge = pos == 0
    right_edge = pos == (L - 1)
    in_seq0 = col < L                                                 # batch-0 columns

    h = _group_norm(x, g1_ref[...], b1_ref[...], gmat, in_seq0)
    h = _conv3(_silu(h), w1_ref[...], left_edge, right_edge)
    h = h + add1_ref[...]            # folded: emb_proj(emb) + linear bias + conv1 bias
    h = _group_norm(h, g2_ref[...], b2_ref[...], gmat, in_seq0)
    h = _conv3(_silu(h), w2_ref[...], left_edge, right_edge)
    h = h + cb2_ref[...]
    out_ref[...] = (x + h).astype(out_ref.dtype)


@jax.jit
def resblock(x, emb, p):
    # ---- wrapper-side constant folding / layout plumbing (grid-invariant, done once) ----
    xf = jnp.transpose(x, (1, 0, 2)).reshape(C, BL)                   # (C, B*L)
    w1f = jnp.transpose(p["w1"], (1, 0, 2)).reshape(C, 3 * C)         # (C_out, 3*C_in)
    w2f = jnp.transpose(p["w2"], (1, 0, 2)).reshape(C, 3 * C)
    # emb projection + Linear bias + conv1 bias, pre-broadcast over lanes per batch.
    add1 = emb @ p["we"].T + p["be"].reshape(1, C) + p["cb1"].reshape(1, C)   # (B, C)
    add1f = jnp.broadcast_to(add1.T[:, :, None], (C, B, L)).reshape(C, BL)
    # Block-diagonal group indicator: gmat @ per_channel_sums = group sums broadcast per channel.
    gmat = jnp.kron(jnp.eye(G, dtype=jnp.float32), jnp.ones((CG, CG), jnp.float32))

    args = (xf, add1f, gmat, p["g1"], p["b1"], w1f, p["g2"], p["b2"], w2f, p["cb2"])
    in_specs = [pl.BlockSpec(a.shape, lambda i, _nd=a.ndim: (0,) * _nd) for a in args]

    outf = pl.pallas_call(
        resblock_kernel,
        out_shape=jax.ShapeDtypeStruct((C, BL), x.dtype),
        grid=(1,),
        in_specs=in_specs,
        out_specs=pl.BlockSpec((C, BL), lambda i: (0, 0)),
        compiler_params=pltpu.CompilerParams(dimension_semantics=("arbitrary",)),
    )(*args)
    return jnp.transpose(outf.reshape(C, B, L), (1, 0, 2))            # back to (B, C, L)


def resblock_ref(x, emb, p):
    # Pure-JAX reference matching the PyTorch module semantics.
    def gn(h, gamma, beta):
        Bn, Cn, Ln = h.shape
        hg = h.reshape(Bn, G, Cn // G, Ln)
        mean = hg.mean(axis=(2, 3), keepdims=True)
        var = ((hg - mean) ** 2).mean(axis=(2, 3), keepdims=True)
        hn = ((hg - mean) / jnp.sqrt(var + EPS)).reshape(Bn, Cn, Ln)
        return hn * gamma.reshape(1, Cn, 1) + beta.reshape(1, Cn, 1)

    def silu(h):
        return h * jax.nn.sigmoid(h)

    def conv(h, w, bias):  # w: (3, Co, Ci)
        wt = jnp.transpose(w, (1, 2, 0))  # (Co, Ci, 3)
        out = lax.conv_general_dilated(
            h, wt, window_strides=(1,), padding=[(1, 1)],
            dimension_numbers=("NCH", "OIH", "NCH"),
            precision=lax.Precision.HIGHEST)
        return out + bias.reshape(1, -1, 1)

    h = conv(silu(gn(x, p["g1"], p["b1"])), p["w1"], p["cb1"])
    proj = emb @ p["we"].T + p["be"].reshape(1, -1)
    h = h + proj[:, :, None]
    h = conv(silu(gn(h, p["g2"], p["b2"])), p["w2"], p["cb2"])
    return x + h


def init_params(key):
    ks = jax.random.split(key, 12)
    s = 0.1
    return {
        "g1": 1.0 + s * jax.random.normal(ks[0], (C, 1), jnp.float32),
        "b1": s * jax.random.normal(ks[1], (C, 1), jnp.float32),
        "w1": s * jax.random.normal(ks[2], (3, C, C), jnp.float32),   # (k, out, in)
        "cb1": s * jax.random.normal(ks[3], (C, 1), jnp.float32),
        "g2": 1.0 + s * jax.random.normal(ks[4], (C, 1), jnp.float32),
        "b2": s * jax.random.normal(ks[5], (C, 1), jnp.float32),
        "w2": s * jax.random.normal(ks[6], (3, C, C), jnp.float32),
        "cb2": s * jax.random.normal(ks[7], (C, 1), jnp.float32),
        "we": s * jax.random.normal(ks[8], (C, E), jnp.float32),      # Linear weight (out, in)
        "be": s * jax.random.normal(ks[9], (C, 1), jnp.float32),
    }


if __name__ == "__main__":
    key = jax.random.PRNGKey(0)
    kx, ke, kp = jax.random.split(key, 3)
    x = jax.random.normal(kx, (B, C, L), jnp.float32)
    emb = jax.random.normal(ke, (B, E), jnp.float32)
    params = init_params(kp)

    out = jax.block_until_ready(resblock(x, emb, params))
    ref = jax.block_until_ready(resblock_ref(x, emb, params))

    assert out.shape == (B, C, L)
    assert jnp.all(jnp.isfinite(out))
    assert jnp.allclose(out, ref, rtol=5e-2, atol=5e-2), float(jnp.max(jnp.abs(out - ref)))
    print("KERNEL_OK")
</pallas_src>

<mosaic_0001>
module attributes {stable_mosaic.version = 11 : i64} {
  func.func @resblock_kernel(%arg0: i32, %arg1: memref<32x256xf32, #tpu.memory_space<vmem>>, %arg2: memref<32x256xf32, #tpu.memory_space<vmem>>, %arg3: memref<32x32xf32, #tpu.memory_space<vmem>>, %arg4: memref<32x1xf32, #tpu.memory_space<vmem>>, %arg5: memref<32x1xf32, #tpu.memory_space<vmem>>, %arg6: memref<32x96xf32, #tpu.memory_space<vmem>>, %arg7: memref<32x1xf32, #tpu.memory_space<vmem>>, %arg8: memref<32x1xf32, #tpu.memory_space<vmem>>, %arg9: memref<32x96xf32, #tpu.memory_space<vmem>>, %arg10: memref<32x1xf32, #tpu.memory_space<vmem>>, %arg11: memref<32x256xf32, #tpu.memory_space<vmem>>) attributes {dimension_semantics = [#tpu.dimension_semantics<arbitrary>], iteration_bounds = array<i64: 1>, scalar_prefetch = 0 : i64, scratch_operands = 0 : i64, tpu.core_type = #tpu.core_type<tc>, window_params = [{pipeline_mode = #tpu.pipeline_mode<synchronous>, transform_indices = @transform_0, window_bounds = array<i64: 32, 256>}, {pipeline_mode = #tpu.pipeline_mode<synchronous>, transform_indices = @transform_1, window_bounds = array<i64: 32, 256>}, {pipeline_mode = #tpu.pipeline_mode<synchronous>, transform_indices = @transform_2, window_bounds = array<i64: 32, 32>}, {pipeline_mode = #tpu.pipeline_mode<synchronous>, transform_indices = @transform_3, window_bounds = array<i64: 32, 1>}, {pipeline_mode = #tpu.pipeline_mode<synchronous>, transform_indices = @transform_4, window_bounds = array<i64: 32, 1>}, {pipeline_mode = #tpu.pipeline_mode<synchronous>, transform_indices = @transform_5, window_bounds = array<i64: 32, 96>}, {pipeline_mode = #tpu.pipeline_mode<synchronous>, transform_indices = @transform_6, window_bounds = array<i64: 32, 1>}, {pipeline_mode = #tpu.pipeline_mode<synchronous>, transform_indices = @transform_7, window_bounds = array<i64: 32, 1>}, {pipeline_mode = #tpu.pipeline_mode<synchronous>, transform_indices = @transform_8, window_bounds = array<i64: 32, 96>}, {pipeline_mode = #tpu.pipeline_mode<synchronous>, transform_indices = @transform_9, window_bounds = array<i64: 32, 1>}, {pipeline_mode = #tpu.pipeline_mode<synchronous>, transform_indices = @transform_10, window_bounds = array<i64: 32, 256>}]} {
    %c0 = arith.constant 0 : index
    %c0_0 = arith.constant 0 : index
    %0 = vector.load %arg1[%c0, %c0_0] : memref<32x256xf32, #tpu.memory_space<vmem>>, vector<32x256xf32>
    %c0_1 = arith.constant 0 : index
    %c0_2 = arith.constant 0 : index
    %1 = vector.load %arg3[%c0_1, %c0_2] : memref<32x32xf32, #tpu.memory_space<vmem>>, vector<32x32xf32>
    %2 = tpu.iota {dimensions = array<i32: 1>} : vector<32x256xi32>
    %c127_i32 = arith.constant 127 : i32
    %3 = vector.broadcast %c127_i32 : i32 to vector<32x256xi32>
    %4 = arith.andi %2, %3 : vector<32x256xi32>
    %c0_i32 = arith.constant 0 : i32
    %5 = vector.broadcast %c0_i32 : i32 to vector<32x256xi32>
    %6 = arith.cmpi eq, %4, %5 : vector<32x256xi32>
    %c127_i32_3 = arith.constant 127 : i32
    %7 = vector.broadcast %c127_i32_3 : i32 to vector<32x256xi32>
    %8 = arith.cmpi eq, %4, %7 : vector<32x256xi32>
    %c128_i32 = arith.constant 128 : i32
    %9 = vector.broadcast %c128_i32 : i32 to vector<32x256xi32>
    %10 = arith.cmpi slt, %2, %9 : vector<32x256xi32>
    %c0_4 = arith.constant 0 : index
    %c0_5 = arith.constant 0 : index
    %11 = vector.load %arg4[%c0_4, %c0_5] : memref<32x1xf32, #tpu.memory_space<vmem>>, vector<32x1xf32>
    %c0_6 = arith.constant 0 : index
    %c0_7 = arith.constant 0 : index
    %12 = vector.load %arg5[%c0_6, %c0_7] : memref<32x1xf32, #tpu.memory_space<vmem>>, vector<32x1xf32>
    %13 = vector.extract_strided_slice %0 {offsets = [0, 0], sizes = [32, 128], strides = [1, 1]} : vector<32x256xf32> to vector<32x128xf32>
    %14 = vector.extract_strided_slice %0 {offsets = [0, 128], sizes = [32, 128], strides = [1, 1]} : vector<32x256xf32> to vector<32x128xf32>
    %cst = arith.constant dense<0.000000e+00> : vector<32xf32>
    %15 = vector.multi_reduction <add>, %13, %cst [1] : vector<32x128xf32> to vector<32xf32>
    %16 = vector.shape_cast %15 : vector<32xf32> to vector<32x1xf32>
    %17 = arith.mulf %13, %13 : vector<32x128xf32>
    %cst_8 = arith.constant dense<0.000000e+00> : vector<32xf32>
    %18 = vector.multi_reduction <add>, %17, %cst_8 [1] : vector<32x128xf32> to vector<32xf32>
    %19 = vector.shape_cast %18 : vector<32xf32> to vector<32x1xf32>
    %cst_9 = arith.constant dense<0.000000e+00> : vector<32x1xf32>
    %20 = tpu.matmul %1, %16, %cst_9 {dimension_numbers = #tpu.dot_dimension_numbers<[1], [0], [0], [1], [0, 0, 1, 1], [], []>} : vector<32x32xf32>, vector<32x1xf32>, vector<32x1xf32> -> vector<32x1xf32>
    %cst_10 = arith.constant 0.001953125 : f32
    %21 = vector.broadcast %cst_10 : f32 to vector<32x1xf32>
    %22 = arith.mulf %20, %21 : vector<32x1xf32>
    %cst_11 = arith.constant dense<0.000000e+00> : vector<32x1xf32>
    %23 = tpu.matmul %1, %19, %cst_11 {dimension_numbers = #tpu.dot_dimension_numbers<[1], [0], [0], [1], [0, 0, 1, 1], [], []>} : vector<32x32xf32>, vector<32x1xf32>, vector<32x1xf32> -> vector<32x1xf32>
    %cst_12 = arith.constant 0.001953125 : f32
    %24 = vector.broadcast %cst_12 : f32 to vector<32x1xf32>
    %25 = arith.mulf %23, %24 : vector<32x1xf32>
    %26 = arith.mulf %22, %22 : vector<32x1xf32>
    %27 = arith.subf %25, %26 : vector<32x1xf32>
    %cst_13 = arith.constant 0.000000e+00 : f32
    %28 = vector.broadcast %cst_13 : f32 to vector<32x1xf32>
    %29 = arith.maximumf %27, %28 : vector<32x1xf32>
    %cst_14 = arith.constant 9.99999974E-6 : f32
    %30 = vector.broadcast %cst_14 : f32 to vector<32x1xf32>
    %31 = arith.addf %29, %30 : vector<32x1xf32>
    %32 = math.rsqrt %31 : vector<32x1xf32>
    %33 = arith.mulf %11, %32 : vector<32x1xf32>
    %34 = arith.mulf %22, %33 : vector<32x1xf32>
    %35 = arith.subf %12, %34 : vector<32x1xf32>
    %cst_15 = arith.constant dense<0.000000e+00> : vector<32xf32>
    %36 = vector.multi_reduction <add>, %14, %cst_15 [1] : vector<32x128xf32> to vector<32xf32>
    %37 = vector.shape_cast %36 : vector<32xf32> to vector<32x1xf32>
    %38 = arith.mulf %14, %14 : vector<32x128xf32>
    %cst_16 = arith.constant dense<0.000000e+00> : vector<32xf32>
    %39 = vector.multi_reduction <add>, %38, %cst_16 [1] : vector<32x128xf32> to vector<32xf32>
    %40 = vector.shape_cast %39 : vector<32xf32> to vector<32x1xf32>
    %cst_17 = arith.constant dense<0.000000e+00> : vector<32x1xf32>
    %41 = tpu.matmul %1, %37, %cst_17 {dimension_numbers = #tpu.dot_dimension_numbers<[1], [0], [0], [1], [0, 0, 1, 1], [], []>} : vector<32x32xf32>, vector<32x1xf32>, vector<32x1xf32> -> vector<32x1xf32>
    %cst_18 = arith.constant 0.001953125 : f32
    %42 = vector.broadcast %cst_18 : f32 to vector<32x1xf32>
    %43 = arith.mulf %41, %42 : vector<32x1xf32>
    %cst_19 = arith.constant dense<0.000000e+00> : vector<32x1xf32>
    %44 = tpu.matmul %1, %40, %cst_19 {dimension_numbers = #tpu.dot_dimension_numbers<[1], [0], [0], [1], [0, 0, 1, 1], [], []>} : vector<32x32xf32>, vector<32x1xf32>, vector<32x1xf32> -> vector<32x1xf32>
    %cst_20 = arith.constant 0.001953125 : f32
    %45 = vector.broadcast %cst_20 : f32 to vector<32x1xf32>
    %46 = arith.mulf %44, %45 : vector<32x1xf32>
    %47 = arith.mulf %43, %43 : vector<32x1xf32>
    %48 = arith.subf %46, %47 : vector<32x1xf32>
    %cst_21 = arith.constant 0.000000e+00 : f32
    %49 = vector.broadcast %cst_21 : f32 to vector<32x1xf32>
    %50 = arith.maximumf %48, %49 : vector<32x1xf32>
    %cst_22 = arith.constant 9.99999974E-6 : f32
    %51 = vector.broadcast %cst_22 : f32 to vector<32x1xf32>
    %52 = arith.addf %50, %51 : vector<32x1xf32>
    %53 = math.rsqrt %52 : vector<32x1xf32>
    %54 = arith.mulf %11, %53 : vector<32x1xf32>
    %55 = arith.mulf %43, %54 : vector<32x1xf32>
    %56 = arith.subf %12, %55 : vector<32x1xf32>
    %57 = vector.shape_cast %33 : vector<32x1xf32> to vector<32x1xf32>
    %58 = vector.broadcast %57 : vector<32x1xf32> to vector<32x256xf32>
    %59 = vector.shape_cast %54 : vector<32x1xf32> to vector<32x1xf32>
    %60 = vector.broadcast %59 : vector<32x1xf32> to vector<32x256xf32>
    %61 = arith.select %10, %58, %60 : vector<32x256xi1>, vector<32x256xf32>
    %62 = vector.shape_cast %35 : vector<32x1xf32> to vector<32x1xf32>
    %63 = vector.broadcast %62 : vector<32x1xf32> to vector<32x256xf32>
    %64 = vector.shape_cast %56 : vector<32x1xf32> to vector<32x1xf32>
    %65 = vector.broadcast %64 : vector<32x1xf32> to vector<32x256xf32>
    %66 = arith.select %10, %63, %65 : vector<32x256xi1>, vector<32x256xf32>
    %67 = arith.mulf %0, %61 : vector<32x256xf32>
    %68 = arith.addf %67, %66 : vector<32x256xf32>
    %69 = arith.negf %68 : vector<32x256xf32>
    %70 = math.exp %69 : vector<32x256xf32>
    %cst_23 = arith.constant 1.000000e+00 : f32
    %71 = vector.broadcast %cst_23 : f32 to vector<32x256xf32>
    %72 = arith.addf %71, %70 : vector<32x256xf32>
    %73 = arith.divf %71, %72 : vector<32x256xf32>
    %74 = arith.mulf %68, %73 : vector<32x256xf32>
    %c0_24 = arith.constant 0 : index
    %c0_25 = arith.constant 0 : index
    %75 = vector.load %arg6[%c0_24, %c0_25] : memref<32x96xf32, #tpu.memory_space<vmem>>, vector<32x96xf32>
    %76 = vector.extract_strided_slice %74 {offsets = [0, 0], sizes = [32, 128], strides = [1, 1]} : vector<32x256xf32> to vector<32x128xf32>
    %c1_i32 = arith.constant 1 : i32
    %77 = tpu.dynamic_rotate %76 by %c1_i32 dim 1 : vector<32x128xf32>, i32 -> vector<32x128xf32>
    %78 = vector.extract_strided_slice %74 {offsets = [0, 128], sizes = [32, 128], strides = [1, 1]} : vector<32x256xf32> to vector<32x128xf32>
    %c1_i32_26 = arith.constant 1 : i32
    %79 = tpu.dynamic_rotate %78 by %c1_i32_26 dim 1 : vector<32x128xf32>, i32 -> vector<32x128xf32>
    %80 = tpu.concatenate %77, %79 in 1 : vector<32x128xf32>, vector<32x128xf32> -> vector<32x256xf32>
    %81 = vector.extract_strided_slice %74 {offsets = [0, 0], sizes = [32, 128], strides = [1, 1]} : vector<32x256xf32> to vector<32x128xf32>
    %c127_i32_27 = arith.constant 127 : i32
    %82 = tpu.dynamic_rotate %81 by %c127_i32_27 dim 1 : vector<32x128xf32>, i32 -> vector<32x128xf32>
    %83 = vector.extract_strided_slice %74 {offsets = [0, 128], sizes = [32, 128], strides = [1, 1]} : vector<32x256xf32> to vector<32x128xf32>
    %c127_i32_28 = arith.constant 127 : i32
    %84 = tpu.dynamic_rotate %83 by %c127_i32_28 dim 1 : vector<32x128xf32>, i32 -> vector<32x128xf32>
    %85 = tpu.concatenate %82, %84 in 1 : vector<32x128xf32>, vector<32x128xf32> -> vector<32x256xf32>
    %cst_29 = arith.constant 0.000000e+00 : f32
    %86 = vector.broadcast %cst_29 : f32 to vector<32x256xf32>
    %87 = arith.select %6, %86, %80 : vector<32x256xi1>, vector<32x256xf32>
    %cst_30 = arith.constant 0.000000e+00 : f32
    %88 = vector.broadcast %cst_30 : f32 to vector<32x256xf32>
    %89 = arith.select %8, %88, %85 : vector<32x256xi1>, vector<32x256xf32>
    %90 = tpu.concatenate %87, %74, %89 in 0 : vector<32x256xf32>, vector<32x256xf32>, vector<32x256xf32> -> vector<96x256xf32>
    %cst_31 = arith.constant dense<0.000000e+00> : vector<32x256xf32>
    %91 = tpu.matmul %75, %90, %cst_31 {dimension_numbers = #tpu.dot_dimension_numbers<[1], [0], [0], [1], [0, 0, 1, 1], [], []>} : vector<32x96xf32>, vector<96x256xf32>, vector<32x256xf32> -> vector<32x256xf32>
    %c0_32 = arith.constant 0 : index
    %c0_33 = arith.constant 0 : index
    %92 = vector.load %arg2[%c0_32, %c0_33] : memref<32x256xf32, #tpu.memory_space<vmem>>, vector<32x256xf32>
    %93 = arith.addf %91, %92 : vector<32x256xf32>
    %c0_34 = arith.constant 0 : index
    %c0_35 = arith.constant 0 : index
    %94 = vector.load %arg7[%c0_34, %c0_35] : memref<32x1xf32, #tpu.memory_space<vmem>>, vector<32x1xf32>
    %c0_36 = arith.constant 0 : index
    %c0_37 = arith.constant 0 : index
    %95 = vector.load %arg8[%c0_36, %c0_37] : memref<32x1xf32, #tpu.memory_space<vmem>>, vector<32x1xf32>
    %96 = vector.extract_strided_slice %93 {offsets = [0, 0], sizes = [32, 128], strides = [1, 1]} : vector<32x256xf32> to vector<32x128xf32>
    %97 = vector.extract_strided_slice %93 {offsets = [0, 128], sizes = [32, 128], strides = [1, 1]} : vector<32x256xf32> to vector<32x128xf32>
    %cst_38 = arith.constant dense<0.000000e+00> : vector<32xf32>
    %98 = vector.multi_reduction <add>, %96, %cst_38 [1] : vector<32x128xf32> to vector<32xf32>
    %99 = vector.shape_cast %98 : vector<32xf32> to vector<32x1xf32>
    %100 = arith.mulf %96, %96 : vector<32x128xf32>
    %cst_39 = arith.constant dense<0.000000e+00> : vector<32xf32>
    %101 = vector.multi_reduction <add>, %100, %cst_39 [1] : vector<32x128xf32> to vector<32xf32>
    %102 = vector.shape_cast %101 : vector<32xf32> to vector<32x1xf32>
    %cst_40 = arith.constant dense<0.000000e+00> : vector<32x1xf32>
    %103 = tpu.matmul %1, %99, %cst_40 {dimension_numbers = #tpu.dot_dimension_numbers<[1], [0], [0], [1], [0, 0, 1, 1], [], []>} : vector<32x32xf32>, vector<32x1xf32>, vector<32x1xf32> -> vector<32x1xf32>
    %cst_41 = arith.constant 0.001953125 : f32
    %104 = vector.broadcast %cst_41 : f32 to vector<32x1xf32>
    %105 = arith.mulf %103, %104 : vector<32x1xf32>
    %cst_42 = arith.constant dense<0.000000e+00> : vector<32x1xf32>
    %106 = tpu.matmul %1, %102, %cst_42 {dimension_numbers = #tpu.dot_dimension_numbers<[1], [0], [0], [1], [0, 0, 1, 1], [], []>} : vector<32x32xf32>, vector<32x1xf32>, vector<32x1xf32> -> vector<32x1xf32>
    %cst_43 = arith.constant 0.001953125 : f32
    %107 = vector.broadcast %cst_43 : f32 to vector<32x1xf32>
    %108 = arith.mulf %106, %107 : vector<32x1xf32>
    %109 = arith.mulf %105, %105 : vector<32x1xf32>
    %110 = arith.subf %108, %109 : vector<32x1xf32>
    %cst_44 = arith.constant 0.000000e+00 : f32
    %111 = vector.broadcast %cst_44 : f32 to vector<32x1xf32>
    %112 = arith.maximumf %110, %111 : vector<32x1xf32>
    %cst_45 = arith.constant 9.99999974E-6 : f32
    %113 = vector.broadcast %cst_45 : f32 to vector<32x1xf32>
    %114 = arith.addf %112, %113 : vector<32x1xf32>
    %115 = math.rsqrt %114 : vector<32x1xf32>
    %116 = arith.mulf %94, %115 : vector<32x1xf32>
    %117 = arith.mulf %105, %116 : vector<32x1xf32>
    %118 = arith.subf %95, %117 : vector<32x1xf32>
    %cst_46 = arith.constant dense<0.000000e+00> : vector<32xf32>
    %119 = vector.multi_reduction <add>, %97, %cst_46 [1] : vector<32x128xf32> to vector<32xf32>
    %120 = vector.shape_cast %119 : vector<32xf32> to vector<32x1xf32>
    %121 = arith.mulf %97, %97 : vector<32x128xf32>
    %cst_47 = arith.constant dense<0.000000e+00> : vector<32xf32>
    %122 = vector.multi_reduction <add>, %121, %cst_47 [1] : vector<32x128xf32> to vector<32xf32>
    %123 = vector.shape_cast %122 : vector<32xf32> to vector<32x1xf32>
    %cst_48 = arith.constant dense<0.000000e+00> : vector<32x1xf32>
    %124 = tpu.matmul %1, %120, %cst_48 {dimension_numbers = #tpu.dot_dimension_numbers<[1], [0], [0], [1], [0, 0, 1, 1], [], []>} : vector<32x32xf32>, vector<32x1xf32>, vector<32x1xf32> -> vector<32x1xf32>
    %cst_49 = arith.constant 0.001953125 : f32
    %125 = vector.broadcast %cst_49 : f32 to vector<32x1xf32>
    %126 = arith.mulf %124, %125 : vector<32x1xf32>
    %cst_50 = arith.constant dense<0.000000e+00> : vector<32x1xf32>
    %127 = tpu.matmul %1, %123, %cst_50 {dimension_numbers = #tpu.dot_dimension_numbers<[1], [0], [0], [1], [0, 0, 1, 1], [], []>} : vector<32x32xf32>, vector<32x1xf32>, vector<32x1xf32> -> vector<32x1xf32>
    %cst_51 = arith.constant 0.001953125 : f32
    %128 = vector.broadcast %cst_51 : f32 to vector<32x1xf32>
    %129 = arith.mulf %127, %128 : vector<32x1xf32>
    %130 = arith.mulf %126, %126 : vector<32x1xf32>
    %131 = arith.subf %129, %130 : vector<32x1xf32>
    %cst_52 = arith.constant 0.000000e+00 : f32
    %132 = vector.broadcast %cst_52 : f32 to vector<32x1xf32>
    %133 = arith.maximumf %131, %132 : vector<32x1xf32>
    %cst_53 = arith.constant 9.99999974E-6 : f32
    %134 = vector.broadcast %cst_53 : f32 to vector<32x1xf32>
    %135 = arith.addf %133, %134 : vector<32x1xf32>
    %136 = math.rsqrt %135 : vector<32x1xf32>
    %137 = arith.mulf %94, %136 : vector<32x1xf32>
    %138 = arith.mulf %126, %137 : vector<32x1xf32>
    %139 = arith.subf %95, %138 : vector<32x1xf32>
    %140 = vector.shape_cast %116 : vector<32x1xf32> to vector<32x1xf32>
    %141 = vector.broadcast %140 : vector<32x1xf32> to vector<32x256xf32>
    %142 = vector.shape_cast %137 : vector<32x1xf32> to vector<32x1xf32>
    %143 = vector.broadcast %142 : vector<32x1xf32> to vector<32x256xf32>
    %144 = arith.select %10, %141, %143 : vector<32x256xi1>, vector<32x256xf32>
    %145 = vector.shape_cast %118 : vector<32x1xf32> to vector<32x1xf32>
    %146 = vector.broadcast %145 : vector<32x1xf32> to vector<32x256xf32>
    %147 = vector.shape_cast %139 : vector<32x1xf32> to vector<32x1xf32>
    %148 = vector.broadcast %147 : vector<32x1xf32> to vector<32x256xf32>
    %149 = arith.select %10, %146, %148 : vector<32x256xi1>, vector<32x256xf32>
    %150 = arith.mulf %93, %144 : vector<32x256xf32>
    %151 = arith.addf %150, %149 : vector<32x256xf32>
    %152 = arith.negf %151 : vector<32x256xf32>
    %153 = math.exp %152 : vector<32x256xf32>
    %cst_54 = arith.constant 1.000000e+00 : f32
    %154 = vector.broadcast %cst_54 : f32 to vector<32x256xf32>
    %155 = arith.addf %154, %153 : vector<32x256xf32>
    %156 = arith.divf %154, %155 : vector<32x256xf32>
    %157 = arith.mulf %151, %156 : vector<32x256xf32>
    %c0_55 = arith.constant 0 : index
    %c0_56 = arith.constant 0 : index
    %158 = vector.load %arg9[%c0_55, %c0_56] : memref<32x96xf32, #tpu.memory_space<vmem>>, vector<32x96xf32>
    %159 = vector.extract_strided_slice %157 {offsets = [0, 0], sizes = [32, 128], strides = [1, 1]} : vector<32x256xf32> to vector<32x128xf32>
    %c1_i32_57 = arith.constant 1 : i32
    %160 = tpu.dynamic_rotate %159 by %c1_i32_57 dim 1 : vector<32x128xf32>, i32 -> vector<32x128xf32>
    %161 = vector.extract_strided_slice %157 {offsets = [0, 128], sizes = [32, 128], strides = [1, 1]} : vector<32x256xf32> to vector<32x128xf32>
    %c1_i32_58 = arith.constant 1 : i32
    %162 = tpu.dynamic_rotate %161 by %c1_i32_58 dim 1 : vector<32x128xf32>, i32 -> vector<32x128xf32>
    %163 = tpu.concatenate %160, %162 in 1 : vector<32x128xf32>, vector<32x128xf32> -> vector<32x256xf32>
    %164 = vector.extract_strided_slice %157 {offsets = [0, 0], sizes = [32, 128], strides = [1, 1]} : vector<32x256xf32> to vector<32x128xf32>
    %c127_i32_59 = arith.constant 127 : i32
    %165 = tpu.dynamic_rotate %164 by %c127_i32_59 dim 1 : vector<32x128xf32>, i32 -> vector<32x128xf32>
    %166 = vector.extract_strided_slice %157 {offsets = [0, 128], sizes = [32, 128], strides = [1, 1]} : vector<32x256xf32> to vector<32x128xf32>
    %c127_i32_60 = arith.constant 127 : i32
    %167 = tpu.dynamic_rotate %166 by %c127_i32_60 dim 1 : vector<32x128xf32>, i32 -> vector<32x128xf32>
    %168 = tpu.concatenate %165, %167 in 1 : vector<32x128xf32>, vector<32x128xf32> -> vector<32x256xf32>
    %cst_61 = arith.constant 0.000000e+00 : f32
    %169 = vector.broadcast %cst_61 : f32 to vector<32x256xf32>
    %170 = arith.select %6, %169, %163 : vector<32x256xi1>, vector<32x256xf32>
    %cst_62 = arith.constant 0.000000e+00 : f32
    %171 = vector.broadcast %cst_62 : f32 to vector<32x256xf32>
    %172 = arith.select %8, %171, %168 : vector<32x256xi1>, vector<32x256xf32>
    %173 = tpu.concatenate %170, %157, %172 in 0 : vector<32x256xf32>, vector<32x256xf32>, vector<32x256xf32> -> vector<96x256xf32>
    %cst_63 = arith.constant dense<0.000000e+00> : vector<32x256xf32>
    %174 = tpu.matmul %158, %173, %cst_63 {dimension_numbers = #tpu.dot_dimension_numbers<[1], [0], [0], [1], [0, 0, 1, 1], [], []>} : vector<32x96xf32>, vector<96x256xf32>, vector<32x256xf32> -> vector<32x256xf32>
    %c0_64 = arith.constant 0 : index
    %c0_65 = arith.constant 0 : index
    %175 = vector.load %arg10[%c0_64, %c0_65] : memref<32x1xf32, #tpu.memory_space<vmem>>, vector<32x1xf32>
    %176 = vector.broadcast %175 : vector<32x1xf32> to vector<32x256xf32>
    %177 = arith.addf %174, %176 : vector<32x256xf32>
    %178 = arith.addf %0, %177 : vector<32x256xf32>
    %c0_66 = arith.constant 0 : index
    %c0_67 = arith.constant 0 : index
    %179 = vector.load %arg11[%c0_66, %c0_67] : memref<32x256xf32, #tpu.memory_space<vmem>>, vector<32x256xf32>
    tpu.vector_store %arg11[%c0_66, %c0_67], %178 {strides = array<i32>} : memref<32x256xf32, #tpu.memory_space<vmem>>, vector<32x256xf32>,
    return
  }
  func.func @transform_0(%arg0: i32) -> (i32, i32) {
    %c0_i32 = arith.constant 0 : i32
    %c0_i32_0 = arith.constant 0 : i32
    %c0_i32_1 = arith.constant 0 : i32
    return %c0_i32, %c0_i32_0 : i32, i32
  }
  func.func @transform_1(%arg0: i32) -> (i32, i32) {
    %c0_i32 = arith.constant 0 : i32
    %c0_i32_0 = arith.constant 0 : i32
    %c0_i32_1 = arith.constant 0 : i32
    return %c0_i32, %c0_i32_0 : i32, i32
  }
  func.func @transform_2(%arg0: i32) -> (i32, i32) {
    %c0_i32 = arith.constant 0 : i32
    %c0_i32_0 = arith.constant 0 : i32
    %c0_i32_1 = arith.constant 0 : i32
    return %c0_i32, %c0_i32_0 : i32, i32
  }
  func.func @transform_3(%arg0: i32) -> (i32, i32) {
    %c0_i32 = arith.constant 0 : i32
    %c0_i32_0 = arith.constant 0 : i32
    %c0_i32_1 = arith.constant 0 : i32
    return %c0_i32, %c0_i32_0 : i32, i32
  }
  func.func @transform_4(%arg0: i32) -> (i32, i32) {
    %c0_i32 = arith.constant 0 : i32
    %c0_i32_0 = arith.constant 0 : i32
    %c0_i32_1 = arith.constant 0 : i32
    return %c0_i32, %c0_i32_0 : i32, i32
  }
  func.func @transform_5(%arg0: i32) -> (i32, i32) {
    %c0_i32 = arith.constant 0 : i32
    %c0_i32_0 = arith.constant 0 : i32
    %c0_i32_1 = arith.constant 0 : i32
    return %c0_i32, %c0_i32_0 : i32, i32
  }
  func.func @transform_6(%arg0: i32) -> (i32, i32) {
    %c0_i32 = arith.constant 0 : i32
    %c0_i32_0 = arith.constant 0 : i32
    %c0_i32_1 = arith.constant 0 : i32
    return %c0_i32, %c0_i32_0 : i32, i32
  }
  func.func @transform_7(%arg0: i32) -> (i32, i32) {
    %c0_i32 = arith.constant 0 : i32
    %c0_i32_0 = arith.constant 0 : i32
    %c0_i32_1 = arith.constant 0 : i32
    return %c0_i32, %c0_i32_0 : i32, i32
  }
  func.func @transform_8(%arg0: i32) -> (i32, i32) {
    %c0_i32 = arith.constant 0 : i32
    %c0_i32_0 = arith.constant 0 : i32
    %c0_i32_1 = arith.constant 0 : i32
    return %c0_i32, %c0_i32_0 : i32, i32
  }
  func.func @transform_9(%arg0: i32) -> (i32, i32) {
    %c0_i32 = arith.constant 0 : i32
    %c0_i32_0 = arith.constant 0 : i32
    %c0_i32_1 = arith.constant 0 : i32
    return %c0_i32, %c0_i32_0 : i32, i32
  }
  func.func @transform_10(%arg0: i32) -> (i32, i32) {
    %c0_i32 = arith.constant 0 : i32
    %c0_i32_0 = arith.constant 0 : i32
    %c0_i32_1 = arith.constant 0 : i32
    return %c0_i32, %c0_i32_0 : i32, i32
  }
}

</mosaic_0001>

<llo_original>
// kernel: resblock.1
$region0: #{resblock.1}
  #allocation0 [shape = 'u32[]', space=smem, size = 0x4, offset = 0x4, fixed_abs, tag = 'smem constant byte address 0x4 - core index']
  #allocation1 [shape = 'u32[72,128]{1,0:T(1,128)}', space=vmem, size = 0x9000, scoped, tag = 'internal scratch']
  %s0 = inlined_call_operand.vmem [shape: f32[32,256], index: 0, kind: input, shape index: {}]
  %s1 = inlined_call_operand.vmem [shape: f32[32,256], index: 1, kind: input, shape index: {}]
  %s2 = inlined_call_operand.vmem [shape: f32[32,32], index: 2, kind: input, shape index: {}]
  %s3 = inlined_call_operand.vmem [shape: f32[32,1], index: 3, kind: input, shape index: {}]
  %s4 = inlined_call_operand.vmem [shape: f32[32,1], index: 4, kind: input, shape index: {}]
  %s5 = inlined_call_operand.vmem [shape: f32[32,96], index: 5, kind: input, shape index: {}]
  %s6 = inlined_call_operand.vmem [shape: f32[32,1], index: 6, kind: input, shape index: {}]
  %s7 = inlined_call_operand.vmem [shape: f32[32,1], index: 7, kind: input, shape index: {}]
  %s8 = inlined_call_operand.vmem [shape: f32[32,96], index: 8, kind: input, shape index: {}]
  %s9 = inlined_call_operand.vmem [shape: f32[32,1], index: 9, kind: input, shape index: {}]
  %s10 = inlined_call_operand.vmem [shape: f32[32,256], index: 10, kind: output, shape index: {}]
  %s11 = sld [smem:[#allocation0]]
  $region50: #{resblock.1} parent=0
    _
  %s13 = ssub.s32 1, %s11
  %s14 = scalar_select 0, %s13, %s11
  // Predicated region
  $region2: #{resblock.1} parent=0 // pred_check
    _
  $region3: #{resblock.1} parent=0 // pred_check_branch
    %16 = sbr.rel (0) target = $region5
  $region4: #{resblock.1} parent=0 // pred_region
    _
  $region5: #{resblock.1} parent=0 // pred_fallthru
    _
  // Predicated region
  $region6: #{resblock.1} parent=0 // pred_check
    _
  $region7: #{resblock.1} parent=0 // pred_check_branch
    %18 = sbr.rel (0) target = $region9
  $region8: #{resblock.1} parent=0 // pred_region
    _
  $region9: #{resblock.1} parent=0 // pred_fallthru
    _
  // Predicated region
  $region10: #{resblock.1} parent=0 // pred_check
    _
  $region11: #{resblock.1} parent=0 // pred_check_branch
    %20 = sbr.rel (0) target = $region13
  $region12: #{resblock.1} parent=0 // pred_region
    _
  $region13: #{resblock.1} parent=0 // pred_fallthru
    _
  // Predicated region
  $region14: #{resblock.1} parent=0 // pred_check
    _
  $region15: #{resblock.1} parent=0 // pred_check_branch
    %22 = sbr.rel (0) target = $region17
  $region16: #{resblock.1} parent=0 // pred_region
    _
  $region17: #{resblock.1} parent=0 // pred_fallthru
    _
  // Predicated region
  $region18: #{resblock.1} parent=0 // pred_check
    _
  $region19: #{resblock.1} parent=0 // pred_check_branch
    %24 = sbr.rel (0) target = $region21
  $region20: #{resblock.1} parent=0 // pred_region
    _
  $region21: #{resblock.1} parent=0 // pred_fallthru
    _
  // Predicated region
  $region22: #{resblock.1} parent=0 // pred_check
    _
  $region23: #{resblock.1} parent=0 // pred_check_branch
    %26 = sbr.rel (0) target = $region25
  $region24: #{resblock.1} parent=0 // pred_region
    _
  $region25: #{resblock.1} parent=0 // pred_fallthru
    _
  // Predicated region
  $region26: #{resblock.1} parent=0 // pred_check
    _
  $region27: #{resblock.1} parent=0 // pred_check_branch
    %28 = sbr.rel (0) target = $region29
  $region28: #{resblock.1} parent=0 // pred_region
    _
  $region29: #{resblock.1} parent=0 // pred_fallthru
    _
  // Predicated region
  $region30: #{resblock.1} parent=0 // pred_check
    _
  $region31: #{resblock.1} parent=0 // pred_check_branch
    %30 = sbr.rel (0) target = $region33
  $region32: #{resblock.1} parent=0 // pred_region
    _
  $region33: #{resblock.1} parent=0 // pred_fallthru
    _
  // Predicated region
  $region34: #{resblock.1} parent=0 // pred_check
    _
  $region35: #{resblock.1} parent=0 // pred_check_branch
    %32 = sbr.rel (0) target = $region37
  $region36: #{resblock.1} parent=0 // pred_region
    _
  $region37: #{resblock.1} parent=0 // pred_fallthru
    _
  // Predicated region
  $region38: #{resblock.1} parent=0 // pred_check
    _
  $region39: #{resblock.1} parent=0 // pred_check_branch
    %34 = sbr.rel (0) target = $region41
  $region40: #{resblock.1} parent=0 // pred_region
    _
  $region41: #{resblock.1} parent=0 // pred_fallthru
    _
  %v35 = vld [vmem:[%s0] sm:$0xff]
  %v36 = vld [vmem:[%s0 + $0x8] sm:$0xff]
  %v37 = vld [vmem:[%s0 + $0x10] sm:$0xff]
  %v38 = vld [vmem:[%s0 + $0x18] sm:$0xff]
  %v39 = vld [vmem:[%s0 + $0x20] sm:$0xff]
  %v40 = vld [vmem:[%s0 + $0x28] sm:$0xff]
  %v41 = vld [vmem:[%s0 + $0x30] sm:$0xff]
  %v42 = vld [vmem:[%s0 + $0x38] sm:$0xff]
  %v43 = vld [vmem:[%s2] sm:$0xff]
  %v44 = vld [vmem:[%s2 + $0x8] sm:$0xff]
  %v45 = vld [vmem:[%s2 + $0x10] sm:$0xff]
  %v46 = vld [vmem:[%s2 + $0x18] sm:$0xff]
  %v47 = vlaneseq
  %v48 = vand.u32 %v47, 127
  %v49 = vadd.s32 %v48, 128
  %v50 = vand.u32 %v48, 127
  %v51 = vand.u32 %v49, 127
  %vm52 = vcmp.eq.s32.totalorder %v50, 0
  %vm53 = vcmp.eq.s32.totalorder %v51, 0
  %vm54 = vcmp.eq.s32.totalorder %v50, 127
  %vm55 = vcmp.eq.s32.totalorder %v51, 127
  %vm56 = vcmp.lt.s32.totalorder %v48, 128
  %vm57 = vcmp.lt.s32.totalorder %v49, 128
  %v58 = vld [vmem:[%s3] sm:$0xff]
  %v59 = vld [vmem:[%s3 + $0x8] sm:$0xff]
  %v60 = vld [vmem:[%s3 + $0x10] sm:$0xff]
  %v61 = vld [vmem:[%s3 + $0x18] sm:$0xff]
  %v62 = vld [vmem:[%s4] sm:$0xff]
  %v63 = vld [vmem:[%s4 + $0x8] sm:$0xff]
  %v64 = vld [vmem:[%s4 + $0x10] sm:$0xff]
  %v65 = vld [vmem:[%s4 + $0x18] sm:$0xff]
  %66 = vadd.xlane.f32.xlu0 %v35
  %v67 = vpop.xlane.xlu0 %66
  %68 = vadd.xlane.f32.xlu0 %v37
  %v69 = vpop.xlane.xlu0 %68
  %70 = vadd.xlane.f32.xlu0 %v39
  %v71 = vpop.xlane.xlu0 %70
  %72 = vadd.xlane.f32.xlu0 %v41
  %v73 = vpop.xlane.xlu0 %72
  %v74 = vmul.f32 %v35, %v35
  %v75 = vmul.f32 %v37, %v37
  %v76 = vmul.f32 %v39, %v39
  %v77 = vmul.f32 %v41, %v41
  %78 = vadd.xlane.f32.xlu0 %v74
  %v79 = vpop.xlane.xlu0 %78
  %80 = vadd.xlane.f32.xlu0 %v75
  %v81 = vpop.xlane.xlu0 %80
  %82 = vadd.xlane.f32.xlu0 %v76
  %v83 = vpop.xlane.xlu0 %82
  %84 = vadd.xlane.f32.xlu0 %v77
  %v85 = vpop.xlane.xlu0 %84
  %vm86 = vcmask 261120
  %v88 = vsel %vm86, %v43, 0
  %v91 = vsel %vm86, %v44, 0
  %v94 = vsel %vm86, %v45, 0
  %v97 = vsel %vm86, %v46, 0
  %99 = vmatpush.msra.mxu0 0.0
  %100 = vmatpush.msra.mxu0 0.0
  %101 = vmatpush.msra.mxu0 0.0
  %102 = vmatpush.msra.mxu0 0.0
  %103 = vmatpush.msra.mxu0 0.0
  %104 = vmatpush.msra.mxu0 0.0
  %105 = vmatpush.msra.mxu0 0.0
  %106 = vmatpush.msra.mxu0 0.0
  %107 = vmatpush.msra.mxu0 0.0
  %108 = vmatpush.msra.mxu0 0.0
  %109 = vmatpush.msra.mxu0 0.0
  %110 = vmatpush.msra.mxu0 0.0
  %111 = vmatpush.msra.mxu0 %v73
  %112 = vmatpush.msra.mxu0 %v71
  %113 = vmatpush.msra.mxu0 %v69
  %114 = vmatpush.msra.mxu0 %v67
  %115 = vmatmul.f32.gmra.mxu0 %v88
  %v116 = vpop.f32.mrf.mxu0
  %v117 = vadd.f32 0.0, %v116
  %118 = vmatmul.f32.gmra.mxu0 %v91
  %v119 = vpop.f32.mrf.mxu0
  %v120 = vadd.f32 0.0, %v119
  %121 = vmatmul.f32.gmra.mxu0 %v94
  %v122 = vpop.f32.mrf.mxu0
  %v123 = vadd.f32 0.0, %v122
  %124 = vmatmul.f32.gmra.mxu0 %v97
  %v125 = vpop.f32.mrf.mxu0
  %v126 = vadd.f32 0.0, %v125
  %127 = vdwg.mxu0
  %v128 = vmul.f32 %v117, 0.001953125
  %v129 = vmul.f32 %v120, 0.001953125
  %v130 = vmul.f32 %v123, 0.001953125
  %v131 = vmul.f32 %v126, 0.001953125
  %132 = vmatpush.msra.mxu0 0.0
  %133 = vmatpush.msra.mxu0 0.0
  %134 = vmatpush.msra.mxu0 0.0
  %135 = vmatpush.msra.mxu0 0.0
  %136 = vmatpush.msra.mxu0 0.0
  %137 = vmatpush.msra.mxu0 0.0
  %138 = vmatpush.msra.mxu0 0.0
  %139 = vmatpush.msra.mxu0 0.0
  %140 = vmatpush.msra.mxu0 0.0
  %141 = vmatpush.msra.mxu0 0.0
  %142 = vmatpush.msra.mxu0 0.0
  %143 = vmatpush.msra.mxu0 0.0
  %144 = vmatpush.msra.mxu0 %v85
  %145 = vmatpush.msra.mxu0 %v83
  %146 = vmatpush.msra.mxu0 %v81
  %147 = vmatpush.msra.mxu0 %v79
  %148 = vmatmul.f32.gmra.mxu0 %v88
  %v149 = vpop.f32.mrf.mxu0
  %v150 = vadd.f32 0.0, %v149
  %151 = vmatmul.f32.gmra.mxu0 %v91
  %v152 = vpop.f32.mrf.mxu0
  %v153 = vadd.f32 0.0, %v152
  %154 = vmatmul.f32.gmra.mxu0 %v94
  %v155 = vpop.f32.mrf.mxu0
  %v156 = vadd.f32 0.0, %v155
  %157 = vmatmul.f32.gmra.mxu0 %v97
  %v158 = vpop.f32.mrf.mxu0
  %v159 = vadd.f32 0.0, %v158
  %160 = vdwg.mxu0
  %v161 = vmul.f32 %v150, 0.001953125
  %v162 = vmul.f32 %v153, 0.001953125
  %v163 = vmul.f32 %v156, 0.001953125
  %v164 = vmul.f32 %v159, 0.001953125
  %v165 = vmul.f32 %v128, %v128
  %v166 = vmul.f32 %v129, %v129
  %v167 = vmul.f32 %v130, %v130
  %v168 = vmul.f32 %v131, %v131
  %v169 = vsub.f32 %v161, %v165
  %v170 = vsub.f32 %v162, %v166
  %v171 = vsub.f32 %v163, %v167
  %v172 = vsub.f32 %v164, %v168
  %v173 = vmax.f32 %v169, 0.0
  %v174 = vmax.f32 %v170, 0.0
  %v175 = vmax.f32 %v171, 0.0
  %v176 = vmax.f32 %v172, 0.0
  %v177 = vadd.f32 %v173, 1e-05
  %v178 = vadd.f32 %v174, 1e-05
  %v179 = vadd.f32 %v175, 1e-05
  %v180 = vadd.f32 %v176, 1e-05
  %v181 = vrsqrt.pop %v177
  %v182 = vmul.f32 %v181, %v177
  %v183 = vmul.f32 %v182, %v181
  %v184 = vmul.f32 0.5, %v183
  %v185 = vsub.f32 1.5, %v184
  %v186 = vmul.f32 %v181, %v185
  %vm187 = vweird.f32 %v177
  %vm188 = vweird.f32 %v181
  %vm189 = vmor %vm187, %vm188
  %v190 = vsel %vm189, %v181, %v186
  %v191 = vrsqrt.pop %v178
  %v192 = vmul.f32 %v191, %v178
  %v193 = vmul.f32 %v192, %v191
  %v194 = vmul.f32 0.5, %v193
  %v195 = vsub.f32 1.5, %v194
  %v196 = vmul.f32 %v191, %v195
  %vm197 = vweird.f32 %v178
  %vm198 = vweird.f32 %v191
  %vm199 = vmor %vm197, %vm198
  %v200 = vsel %vm199, %v191, %v196
  %v201 = vrsqrt.pop %v179
  %v202 = vmul.f32 %v201, %v179
  %v203 = vmul.f32 %v202, %v201
  %v204 = vmul.f32 0.5, %v203
  %v205 = vsub.f32 1.5, %v204
  %v206 = vmul.f32 %v201, %v205
  %vm207 = vweird.f32 %v179
  %vm208 = vweird.f32 %v201
  %vm209 = vmor %vm207, %vm208
  %v210 = vsel %vm209, %v201, %v206
  %v211 = vrsqrt.pop %v180
  %v212 = vmul.f32 %v211, %v180
  %v213 = vmul.f32 %v212, %v211
  %v214 = vmul.f32 0.5, %v213
  %v215 = vsub.f32 1.5, %v214
  %v216 = vmul.f32 %v211, %v215
  %vm217 = vweird.f32 %v180
  %vm218 = vweird.f32 %v211
  %vm219 = vmor %vm217, %vm218
  %v220 = vsel %vm219, %v211, %v216
  %v221 = vmul.f32 %v58, %v190
  %v222 = vmul.f32 %v59, %v200
  %v223 = vmul.f32 %v60, %v210
  %v224 = vmul.f32 %v61, %v220
  %v225 = vmul.f32 %v128, %v221
  %v226 = vmul.f32 %v129, %v222
  %v227 = vmul.f32 %v130, %v223
  %v228 = vmul.f32 %v131, %v224
  %v229 = vsub.f32 %v62, %v225
  %v230 = vsub.f32 %v63, %v226
  %v231 = vsub.f32 %v64, %v227
  %v232 = vsub.f32 %v65, %v228
  %233 = vadd.xlane.f32.xlu0 %v36
  %v234 = vpop.xlane.xlu0 %233
  %235 = vadd.xlane.f32.xlu0 %v38
  %v236 = vpop.xlane.xlu0 %235
  %237 = vadd.xlane.f32.xlu0 %v40
  %v238 = vpop.xlane.xlu0 %237
  %239 = vadd.xlane.f32.xlu0 %v42
  %v240 = vpop.xlane.xlu0 %239
  %v241 = vmul.f32 %v36, %v36
  %v242 = vmul.f32 %v38, %v38
  %v243 = vmul.f32 %v40, %v40
  %v244 = vmul.f32 %v42, %v42
  %245 = vadd.xlane.f32.xlu0 %v241
  %v246 = vpop.xlane.xlu0 %245
  %247 = vadd.xlane.f32.xlu0 %v242
  %v248 = vpop.xlane.xlu0 %247
  %249 = vadd.xlane.f32.xlu0 %v243
  %v250 = vpop.xlane.xlu0 %249
  %251 = vadd.xlane.f32.xlu0 %v244
  %v252 = vpop.xlane.xlu0 %251
  %253 = vmatpush.msra.mxu0 0.0
  %254 = vmatpush.msra.mxu0 0.0
  %255 = vmatpush.msra.mxu0 0.0
  %256 = vmatpush.msra.mxu0 0.0
  %257 = vmatpush.msra.mxu0 0.0
  %258 = vmatpush.msra.mxu0 0.0
  %259 = vmatpush.msra.mxu0 0.0
  %260 = vmatpush.msra.mxu0 0.0
  %261 = vmatpush.msra.mxu0 0.0
  %262 = vmatpush.msra.mxu0 0.0
  %263 = vmatpush.msra.mxu0 0.0
  %264 = vmatpush.msra.mxu0 0.0
  %265 = vmatpush.msra.mxu0 %v240
  %266 = vmatpush.msra.mxu0 %v238
  %267 = vmatpush.msra.mxu0 %v236
  %268 = vmatpush.msra.mxu0 %v234
  %269 = vmatmul.f32.gmra.mxu0 %v88
  %v270 = vpop.f32.mrf.mxu0
  %v271 = vadd.f32 0.0, %v270
  %272 = vmatmul.f32.gmra.mxu0 %v91
  %v273 = vpop.f32.mrf.mxu0
  %v274 = vadd.f32 0.0, %v273
  %275 = vmatmul.f32.gmra.mxu0 %v94
  %v276 = vpop.f32.mrf.mxu0
  %v277 = vadd.f32 0.0, %v276
  %278 = vmatmul.f32.gmra.mxu0 %v97
  %v279 = vpop.f32.mrf.mxu0
  %v280 = vadd.f32 0.0, %v279
  %281 = vdwg.mxu0
  %v282 = vmul.f32 %v271, 0.001953125
  %v283 = vmul.f32 %v274, 0.001953125
  %v284 = vmul.f32 %v277, 0.001953125
  %v285 = vmul.f32 %v280, 0.001953125
  %286 = vmatpush.msra.mxu0 0.0
  %287 = vmatpush.msra.mxu0 0.0
  %288 = vmatpush.msra.mxu0 0.0
  %289 = vmatpush.msra.mxu0 0.0
  %290 = vmatpush.msra.mxu0 0.0
  %291 = vmatpush.msra.mxu0 0.0
  %292 = vmatpush.msra.mxu0 0.0
  %293 = vmatpush.msra.mxu0 0.0
  %294 = vmatpush.msra.mxu0 0.0
  %295 = vmatpush.msra.mxu0 0.0
  %296 = vmatpush.msra.mxu0 0.0
  %297 = vmatpush.msra.mxu0 0.0
  %298 = vmatpush.msra.mxu0 %v252
  %299 = vmatpush.msra.mxu0 %v250
  %300 = vmatpush.msra.mxu0 %v248
  %301 = vmatpush.msra.mxu0 %v246
  %302 = vmatmul.f32.gmra.mxu0 %v88
  %v303 = vpop.f32.mrf.mxu0
  %v304 = vadd.f32 0.0, %v303
  %305 = vmatmul.f32.gmra.mxu0 %v91
  %v306 = vpop.f32.mrf.mxu0
  %v307 = vadd.f32 0.0, %v306
  %308 = vmatmul.f32.gmra.mxu0 %v94
  %v309 = vpop.f32.mrf.mxu0
  %v310 = vadd.f32 0.0, %v309
  %311 = vmatmul.f32.gmra.mxu0 %v97
  %v312 = vpop.f32.mrf.mxu0
  %v313 = vadd.f32 0.0, %v312
  %314 = vdwg.mxu0
  %v315 = vmul.f32 %v304, 0.001953125
  %v316 = vmul.f32 %v307, 0.001953125
  %v317 = vmul.f32 %v310, 0.001953125
  %v318 = vmul.f32 %v313, 0.001953125
  %v319 = vmul.f32 %v282, %v282
  %v320 = vmul.f32 %v283, %v283
  %v321 = vmul.f32 %v284, %v284
  %v322 = vmul.f32 %v285, %v285
  %v323 = vsub.f32 %v315, %v319
  %v324 = vsub.f32 %v316, %v320
  %v325 = vsub.f32 %v317, %v321
  %v326 = vsub.f32 %v318, %v322
  %v327 = vmax.f32 %v323, 0.0
  %v328 = vmax.f32 %v324, 0.0
  %v329 = vmax.f32 %v325, 0.0
  %v330 = vmax.f32 %v326, 0.0
  %v331 = vadd.f32 %v327, 1e-05
  %v332 = vadd.f32 %v328, 1e-05
  %v333 = vadd.f32 %v329, 1e-05
  %v334 = vadd.f32 %v330, 1e-05
  %v335 = vrsqrt.pop %v331
  %v336 = vmul.f32 %v335, %v331
  %v337 = vmul.f32 %v336, %v335
  %v338 = vmul.f32 0.5, %v337
  %v339 = vsub.f32 1.5, %v338
  %v340 = vmul.f32 %v335, %v339
  %vm341 = vweird.f32 %v331
  %vm342 = vweird.f32 %v335
  %vm343 = vmor %vm341, %vm342
  %v344 = vsel %vm343, %v335, %v340
  %v345 = vrsqrt.pop %v332
  %v346 = vmul.f32 %v345, %v332
  %v347 = vmul.f32 %v346, %v345
  %v348 = vmul.f32 0.5, %v347
  %v349 = vsub.f32 1.5, %v348
  %v350 = vmul.f32 %v345, %v349
  %vm351 = vweird.f32 %v332
  %vm352 = vweird.f32 %v345
  %vm353 = vmor %vm351, %vm352
  %v354 = vsel %vm353, %v345, %v350
  %v355 = vrsqrt.pop %v333
  %v356 = vmul.f32 %v355, %v333
  %v357 = vmul.f32 %v356, %v355
  %v358 = vmul.f32 0.5, %v357
  %v359 = vsub.f32 1.5, %v358
  %v360 = vmul.f32 %v355, %v359
  %vm361 = vweird.f32 %v333
  %vm362 = vweird.f32 %v355
  %vm363 = vmor %vm361, %vm362
  %v364 = vsel %vm363, %v355, %v360
  %v365 = vrsqrt.pop %v334
  %v366 = vmul.f32 %v365, %v334
  %v367 = vmul.f32 %v366, %v365
  %v368 = vmul.f32 0.5, %v367
  %v369 = vsub.f32 1.5, %v368
  %v370 = vmul.f32 %v365, %v369
  %vm371 = vweird.f32 %v334
  %vm372 = vweird.f32 %v365
  %vm373 = vmor %vm371, %vm372
  %v374 = vsel %vm373, %v365, %v370
  %v375 = vmul.f32 %v58, %v344
  %v376 = vmul.f32 %v59, %v354
  %v377 = vmul.f32 %v60, %v364
  %v378 = vmul.f32 %v61, %v374
  %v379 = vmul.f32 %v282, %v375
  %v380 = vmul.f32 %v283, %v376
  %v381 = vmul.f32 %v284, %v377
  %v382 = vmul.f32 %v285, %v378
  %v383 = vsub.f32 %v62, %v379
  %v384 = vsub.f32 %v63, %v380
  %v385 = vsub.f32 %v64, %v381
  %v386 = vsub.f32 %v65, %v382
  %388 = vset.pattern.permute.xlu0 0
  %389 = vperm.xlu0 %388, %v221
  %v390 = vpop.permute.xlu0 %389
  %393 = vset.pattern.permute.xlu0 0
  %394 = vperm.xlu0 %393, %v222
  %v395 = vpop.permute.xlu0 %394
  %398 = vset.pattern.permute.xlu0 0
  %399 = vperm.xlu0 %398, %v223
  %v400 = vpop.permute.xlu0 %399
  %403 = vset.pattern.permute.xlu0 0
  %404 = vperm.xlu0 %403, %v224
  %v405 = vpop.permute.xlu0 %404
  %408 = vset.pattern.permute.xlu0 0
  %409 = vperm.xlu0 %408, %v375
  %v410 = vpop.permute.xlu0 %409
  %413 = vset.pattern.permute.xlu0 0
  %414 = vperm.xlu0 %413, %v376
  %v415 = vpop.permute.xlu0 %414
  %418 = vset.pattern.permute.xlu0 0
  %419 = vperm.xlu0 %418, %v377
  %v420 = vpop.permute.xlu0 %419
  %423 = vset.pattern.permute.xlu0 0
  %424 = vperm.xlu0 %423, %v378
  %v425 = vpop.permute.xlu0 %424
  %v427 = vsel %vm56, %v390, %v410
  %v428 = vsel %vm57, %v390, %v410
  %v429 = vsel %vm56, %v395, %v415
  %v430 = vsel %vm57, %v395, %v415
  %v431 = vsel %vm56, %v400, %v420
  %v432 = vsel %vm57, %v400, %v420
  %v433 = vsel %vm56, %v405, %v425
  %v434 = vsel %vm57, %v405, %v425
  %436 = vset.pattern.permute.xlu0 0
  %437 = vperm.xlu0 %436, %v229
  %v438 = vpop.permute.xlu0 %437
  %441 = vset.pattern.permute.xlu0 0
  %442 = vperm.xlu0 %441, %v230
  %v443 = vpop.permute.xlu0 %442
  %446 = vset.pattern.permute.xlu0 0
  %447 = vperm.xlu0 %446, %v231
  %v448 = vpop.permute.xlu0 %447
  %451 = vset.pattern.permute.xlu0 0
  %452 = vperm.xlu0 %451, %v232
  %v453 = vpop.permute.xlu0 %452
  %456 = vset.pattern.permute.xlu0 0
  %457 = vperm.xlu0 %456, %v383
  %v458 = vpop.permute.xlu0 %457
  %461 = vset.pattern.permute.xlu0 0
  %462 = vperm.xlu0 %461, %v384
  %v463 = vpop.permute.xlu0 %462
  %466 = vset.pattern.permute.xlu0 0
  %467 = vperm.xlu0 %466, %v385
  %v468 = vpop.permute.xlu0 %467
  %471 = vset.pattern.permute.xlu0 0
  %472 = vperm.xlu0 %471, %v386
  %v473 = vpop.permute.xlu0 %472
  %v475 = vsel %vm56, %v438, %v458
  %v476 = vsel %vm57, %v438, %v458
  %v477 = vsel %vm56, %v443, %v463
  %v478 = vsel %vm57, %v443, %v463
  %v479 = vsel %vm56, %v448, %v468
  %v480 = vsel %vm57, %v448, %v468
  %v481 = vsel %vm56, %v453, %v473
  %v482 = vsel %vm57, %v453, %v473
  %v483 = vmul.f32 %v35, %v427
  %v484 = vmul.f32 %v36, %v428
  %v485 = vmul.f32 %v37, %v429
  %v486 = vmul.f32 %v38, %v430
  %v487 = vmul.f32 %v39, %v431
  %v488 = vmul.f32 %v40, %v432
  %v489 = vmul.f32 %v41, %v433
  %v490 = vmul.f32 %v42, %v434
  %v491 = vadd.f32 %v483, %v475
  %v492 = vadd.f32 %v484, %v476
  %v493 = vadd.f32 %v485, %v477
  %v494 = vadd.f32 %v486, %v478
  %v495 = vadd.f32 %v487, %v479
  %v496 = vadd.f32 %v488, %v480
  %v497 = vadd.f32 %v489, %v481
  %v498 = vadd.f32 %v490, %v482
  %v499 = vxor.u32 %v491, 2147483648
  %v500 = vxor.u32 %v492, 2147483648
  %v501 = vxor.u32 %v493, 2147483648
  %v502 = vxor.u32 %v494, 2147483648
  %v503 = vxor.u32 %v495, 2147483648
  %v504 = vxor.u32 %v496, 2147483648
  %v505 = vxor.u32 %v497, 2147483648
  %v506 = vxor.u32 %v498, 2147483648
  %v507 = vmul.f32 %v499, 1.442695
  %v508 = vpow.pop %v507
  %v509 = vmul.f32 %v500, 1.442695
  %v510 = vpow.pop %v509
  %v511 = vmul.f32 %v501, 1.442695
  %v512 = vpow.pop %v511
  %v513 = vmul.f32 %v502, 1.442695
  %v514 = vpow.pop %v513
  %v515 = vmul.f32 %v503, 1.442695
  %v516 = vpow.pop %v515
  %v517 = vmul.f32 %v504, 1.442695
  %v518 = vpow.pop %v517
  %v519 = vmul.f32 %v505, 1.442695
  %v520 = vpow.pop %v519
  %v521 = vmul.f32 %v506, 1.442695
  %v522 = vpow.pop %v521
  %v523 = vadd.f32 %v508, 1.0
  %v524 = vadd.f32 %v510, 1.0
  %v525 = vadd.f32 %v512, 1.0
  %v526 = vadd.f32 %v514, 1.0
  %v527 = vadd.f32 %v516, 1.0
  %v528 = vadd.f32 %v518, 1.0
  %v529 = vadd.f32 %v520, 1.0
  %v530 = vadd.f32 %v522, 1.0
  %v531 = vrcp.pop %v523
  %v532 = vmul.f32 %v523, %v531
  %v533 = vsub.f32 1.0, %v532
  %v534 = vmul.f32 %v531, %v533
  %v535 = vadd.f32 %v531, %v534
  %vm536 = vweird.f32 %v523
  %vm537 = vweird.f32 %v531
  %vm538 = vmor %vm536, %vm537
  %v539 = vsel %vm538, %v531, %v535
  %v540 = vand.u32 2147483647, %v523
  %vm541 = vcmp.eq.f32.partialorder %v540, 8.507059e+37
  %v542 = vand.u32 %v523, 2147483648
  %v543 = vor.u32 1.1754944e-38, %v542
  %v544 = vsel %vm541, %v543, %v539
  %v545 = vmul.f32 1.0, %v544
  %v546 = vrcp.pop %v524
  %v547 = vmul.f32 %v524, %v546
  %v548 = vsub.f32 1.0, %v547
  %v549 = vmul.f32 %v546, %v548
  %v550 = vadd.f32 %v546, %v549
  %vm551 = vweird.f32 %v524
  %vm552 = vweird.f32 %v546
  %vm553 = vmor %vm551, %vm552
  %v554 = vsel %vm553, %v546, %v550
  %v555 = vand.u32 2147483647, %v524
  %vm556 = vcmp.eq.f32.partialorder %v555, 8.507059e+37
  %v557 = vand.u32 %v524, 2147483648
  %v558 = vor.u32 1.1754944e-38, %v557
  %v559 = vsel %vm556, %v558, %v554
  %v560 = vmul.f32 1.0, %v559
  %v561 = vrcp.pop %v525
  %v562 = vmul.f32 %v525, %v561
  %v563 = vsub.f32 1.0, %v562
  %v564 = vmul.f32 %v561, %v563
  %v565 = vadd.f32 %v561, %v564
  %vm566 = vweird.f32 %v525
  %vm567 = vweird.f32 %v561
  %vm568 = vmor %vm566, %vm567
  %v569 = vsel %vm568, %v561, %v565
  %v570 = vand.u32 2147483647, %v525
  %vm571 = vcmp.eq.f32.partialorder %v570, 8.507059e+37
  %v572 = vand.u32 %v525, 2147483648
  %v573 = vor.u32 1.1754944e-38, %v572
  %v574 = vsel %vm571, %v573, %v569
  %v575 = vmul.f32 1.0, %v574
  %v576 = vrcp.pop %v526
  %v577 = vmul.f32 %v526, %v576
  %v578 = vsub.f32 1.0, %v577
  %v579 = vmul.f32 %v576, %v578
  %v580 = vadd.f32 %v576, %v579
  %vm581 = vweird.f32 %v526
  %vm582 = vweird.f32 %v576
  %vm583 = vmor %vm581, %vm582
  %v584 = vsel %vm583, %v576, %v580
  %v585 = vand.u32 2147483647, %v526
  %vm586 = vcmp.eq.f32.partialorder %v585, 8.507059e+37
  %v587 = vand.u32 %v526, 2147483648
  %v588 = vor.u32 1.1754944e-38, %v587
  %v589 = vsel %vm586, %v588, %v584
  %v590 = vmul.f32 1.0, %v589
  %v591 = vrcp.pop %v527
  %v592 = vmul.f32 %v527, %v591
  %v593 = vsub.f32 1.0, %v592
  %v594 = vmul.f32 %v591, %v593
  %v595 = vadd.f32 %v591, %v594
  %vm596 = vweird.f32 %v527
  %vm597 = vweird.f32 %v591
  %vm598 = vmor %vm596, %vm597
  %v599 = vsel %vm598, %v591, %v595
  %v600 = vand.u32 2147483647, %v527
  %vm601 = vcmp.eq.f32.partialorder %v600, 8.507059e+37
  %v602 = vand.u32 %v527, 2147483648
  %v603 = vor.u32 1.1754944e-38, %v602
  %v604 = vsel %vm601, %v603, %v599
  %v605 = vmul.f32 1.0, %v604
  %v606 = vrcp.pop %v528
  %v607 = vmul.f32 %v528, %v606
  %v608 = vsub.f32 1.0, %v607
  %v609 = vmul.f32 %v606, %v608
  %v610 = vadd.f32 %v606, %v609
  %vm611 = vweird.f32 %v528
  %vm612 = vweird.f32 %v606
  %vm613 = vmor %vm611, %vm612
  %v614 = vsel %vm613, %v606, %v610
  %v615 = vand.u32 2147483647, %v528
  %vm616 = vcmp.eq.f32.partialorder %v615, 8.507059e+37
  %v617 = vand.u32 %v528, 2147483648
  %v618 = vor.u32 1.1754944e-38, %v617
  %v619 = vsel %vm616, %v618, %v614
  %v620 = vmul.f32 1.0, %v619
  %v621 = vrcp.pop %v529
  %v622 = vmul.f32 %v529, %v621
  %v623 = vsub.f32 1.0, %v622
  %v624 = vmul.f32 %v621, %v623
  %v625 = vadd.f32 %v621, %v624
  %vm626 = vweird.f32 %v529
  %vm627 = vweird.f32 %v621
  %vm628 = vmor %vm626, %vm627
  %v629 = vsel %vm628, %v621, %v625
  %v630 = vand.u32 2147483647, %v529
  %vm631 = vcmp.eq.f32.partialorder %v630, 8.507059e+37
  %v632 = vand.u32 %v529, 2147483648
  %v633 = vor.u32 1.1754944e-38, %v632
  %v634 = vsel %vm631, %v633, %v629
  %v635 = vmul.f32 1.0, %v634
  %v636 = vrcp.pop %v530
  %v637 = vmul.f32 %v530, %v636
  %v638 = vsub.f32 1.0, %v637
  %v639 = vmul.f32 %v636, %v638
  %v640 = vadd.f32 %v636, %v639
  %vm641 = vweird.f32 %v530
  %vm642 = vweird.f32 %v636
  %vm643 = vmor %vm641, %vm642
  %v644 = vsel %vm643, %v636, %v640
  %v645 = vand.u32 2147483647, %v530
  %vm646 = vcmp.eq.f32.partialorder %v645, 8.507059e+37
  %v647 = vand.u32 %v530, 2147483648
  %v648 = vor.u32 1.1754944e-38, %v647
  %v649 = vsel %vm646, %v648, %v644
  %v650 = vmul.f32 1.0, %v649
  %v651 = vmul.f32 %v491, %v545
  %v652 = vmul.f32 %v492, %v560
  %v653 = vmul.f32 %v493, %v575
  %v654 = vmul.f32 %v494, %v590
  %v655 = vmul.f32 %v495, %v605
  %v656 = vmul.f32 %v496, %v620
  %v657 = vmul.f32 %v497, %v635
  %v658 = vmul.f32 %v498, %v650
  %v659 = vld [vmem:[%s5] sm:$0xff]
  %v660 = vld [vmem:[%s5 + $0x8] sm:$0xff]
  %v661 = vld [vmem:[%s5 + $0x10] sm:$0xff]
  %v662 = vld [vmem:[%s5 + $0x18] sm:$0xff]
  %663 = vrot.lane.b32.xlu0 %v651, 1
  %v664 = vpop.permute.xlu0 %663
  %665 = vrot.lane.b32.xlu0 %v653, 1
  %v666 = vpop.permute.xlu0 %665
  %667 = vrot.lane.b32.xlu0 %v655, 1
  %v668 = vpop.permute.xlu0 %667
  %669 = vrot.lane.b32.xlu0 %v657, 1
  %v670 = vpop.permute.xlu0 %669
  %671 = vrot.lane.b32.xlu0 %v652, 1
  %v672 = vpop.permute.xlu0 %671
  %673 = vrot.lane.b32.xlu0 %v654, 1
  %v674 = vpop.permute.xlu0 %673
  %675 = vrot.lane.b32.xlu0 %v656, 1
  %v676 = vpop.permute.xlu0 %675
  %677 = vrot.lane.b32.xlu0 %v658, 1
  %v678 = vpop.permute.xlu0 %677
  %679 = vrot.lane.b32.xlu0 %v651, 127
  %v680 = vpop.permute.xlu0 %679
  %681 = vrot.lane.b32.xlu0 %v653, 127
  %v682 = vpop.permute.xlu0 %681
  %683 = vrot.lane.b32.xlu0 %v655, 127
  %v684 = vpop.permute.xlu0 %683
  %685 = vrot.lane.b32.xlu0 %v657, 127
  %v686 = vpop.permute.xlu0 %685
  %687 = vrot.lane.b32.xlu0 %v652, 127
  %v688 = vpop.permute.xlu0 %687
  %689 = vrot.lane.b32.xlu0 %v654, 127
  %v690 = vpop.permute.xlu0 %689
  %691 = vrot.lane.b32.xlu0 %v656, 127
  %v692 = vpop.permute.xlu0 %691
  %693 = vrot.lane.b32.xlu0 %v658, 127
  %v694 = vpop.permute.xlu0 %693
  %v695 = vsel %vm52, 0.0, %v664
  %v696 = vsel %vm53, 0.0, %v672
  %v697 = vsel %vm52, 0.0, %v666
  %v698 = vsel %vm53, 0.0, %v674
  %v699 = vsel %vm52, 0.0, %v668
  %v700 = vsel %vm53, 0.0, %v676
  %v701 = vsel %vm52, 0.0, %v670
  %v702 = vsel %vm53, 0.0, %v678
  %v703 = vsel %vm54, 0.0, %v680
  %v704 = vsel %vm55, 0.0, %v688
  %v705 = vsel %vm54, 0.0, %v682
  %v706 = vsel %vm55, 0.0, %v690
  %v707 = vsel %vm54, 0.0, %v684
  %v708 = vsel %vm55, 0.0, %v692
  %v709 = vsel %vm54, 0.0, %v686
  %v710 = vsel %vm55, 0.0, %v694
  %v711 = vld [vmem:[%s1] sm:$0xff]
  %v712 = vld [vmem:[%s1 + $0x8] sm:$0xff]
  %v713 = vld [vmem:[%s1 + $0x10] sm:$0xff]
  %v714 = vld [vmem:[%s1 + $0x18] sm:$0xff]
  %v715 = vld [vmem:[%s1 + $0x20] sm:$0xff]
  %v716 = vld [vmem:[%s1 + $0x28] sm:$0xff]
  %v717 = vld [vmem:[%s1 + $0x30] sm:$0xff]
  %v718 = vld [vmem:[%s1 + $0x38] sm:$0xff]
  %vm719 = vcmask 785408
  %v721 = vsel %vm719, %v659, 0
  %v724 = vsel %vm719, %v660, 0
  %v727 = vsel %vm719, %v661, 0
  %v730 = vsel %vm719, %v662, 0
  %732 = vmatpush.msra.mxu0 0.0
  %733 = vmatpush.msra.mxu0 0.0
  %734 = vmatpush.msra.mxu0 0.0
  %735 = vmatpush.msra.mxu0 0.0
  %736 = vmatpush.msra.mxu0 %v709
  %737 = vmatpush.msra.mxu0 %v707
  %738 = vmatpush.msra.mxu0 %v705
  %739 = vmatpush.msra.mxu0 %v703
  %740 = vmatpush.msra.mxu0 %v657
  %741 = vmatpush.msra.mxu0 %v655
  %742 = vmatpush.msra.mxu0 %v653
  %743 = vmatpush.msra.mxu0 %v651
  %744 = vmatpush.msra.mxu0 %v701
  %745 = vmatpush.msra.mxu0 %v699
  %746 = vmatpush.msra.mxu0 %v697
  %747 = vmatpush.msra.mxu0 %v695
  %748 = vmatmul.f32.gmra.mxu0 %v721
  %v749 = vpop.f32.mrf.mxu0
  %v750 = vadd.f32 %v711, %v749
  %751 = vmatmul.f32.gmra.mxu0 %v724
  %v752 = vpop.f32.mrf.mxu0
  %v753 = vadd.f32 %v713, %v752
  %754 = vmatmul.f32.gmra.mxu0 %v727
  %v755 = vpop.f32.mrf.mxu0
  %v756 = vadd.f32 %v715, %v755
  %757 = vmatmul.f32.gmra.mxu0 %v730
  %v758 = vpop.f32.mrf.mxu0
  %v759 = vadd.f32 %v717, %v758
  %760 = vdwg.mxu0
  %761 = vmatpush.msra.mxu0 0.0
  %762 = vmatpush.msra.mxu0 0.0
  %763 = vmatpush.msra.mxu0 0.0
  %764 = vmatpush.msra.mxu0 0.0
  %765 = vmatpush.msra.mxu0 %v710
  %766 = vmatpush.msra.mxu0 %v708
  %767 = vmatpush.msra.mxu0 %v706
  %768 = vmatpush.msra.mxu0 %v704
  %769 = vmatpush.msra.mxu0 %v658
  %770 = vmatpush.msra.mxu0 %v656
  %771 = vmatpush.msra.mxu0 %v654
  %772 = vmatpush.msra.mxu0 %v652
  %773 = vmatpush.msra.mxu0 %v702
  %774 = vmatpush.msra.mxu0 %v700
  %775 = vmatpush.msra.mxu0 %v698
  %776 = vmatpush.msra.mxu0 %v696
  %777 = vmatmul.f32.gmra.mxu0 %v721
  %v778 = vpop.f32.mrf.mxu0
  %v779 = vadd.f32 %v712, %v778
  %780 = vmatmul.f32.gmra.mxu0 %v724
  %v781 = vpop.f32.mrf.mxu0
  %v782 = vadd.f32 %v714, %v781
  %783 = vmatmul.f32.gmra.mxu0 %v727
  %v784 = vpop.f32.mrf.mxu0
  %v785 = vadd.f32 %v716, %v784
  %786 = vmatmul.f32.gmra.mxu0 %v730
  %v787 = vpop.f32.mrf.mxu0
  %v788 = vadd.f32 %v718, %v787
  %789 = vdwg.mxu0
  %v790 = vld [vmem:[%s6] sm:$0xff]
  %v791 = vld [vmem:[%s6 + $0x8] sm:$0xff]
  %v792 = vld [vmem:[%s6 + $0x10] sm:$0xff]
  %v793 = vld [vmem:[%s6 + $0x18] sm:$0xff]
  %v794 = vld [vmem:[%s7] sm:$0xff]
  %v795 = vld [vmem:[%s7 + $0x8] sm:$0xff]
  %v796 = vld [vmem:[%s7 + $0x10] sm:$0xff]
  %v797 = vld [vmem:[%s7 + $0x18] sm:$0xff]
  %798 = vadd.xlane.f32.xlu0 %v750
  %v799 = vpop.xlane.xlu0 %798
  %800 = vadd.xlane.f32.xlu0 %v753
  %v801 = vpop.xlane.xlu0 %800
  %802 = vadd.xlane.f32.xlu0 %v756
  %v803 = vpop.xlane.xlu0 %802
  %804 = vadd.xlane.f32.xlu0 %v759
  %v805 = vpop.xlane.xlu0 %804
  %v806 = vmul.f32 %v750, %v750
  %v807 = vmul.f32 %v753, %v753
  %v808 = vmul.f32 %v756, %v756
  %v809 = vmul.f32 %v759, %v759
  %810 = vadd.xlane.f32.xlu0 %v806
  %v811 = vpop.xlane.xlu0 %810
  %812 = vadd.xlane.f32.xlu0 %v807
  %v813 = vpop.xlane.xlu0 %812
  %814 = vadd.xlane.f32.xlu0 %v808
  %v815 = vpop.xlane.xlu0 %814
  %816 = vadd.xlane.f32.xlu0 %v809
  %v817 = vpop.xlane.xlu0 %816
  %818 = vmatpush.msra.mxu0 0.0
  %819 = vmatpush.msra.mxu0 0.0
  %820 = vmatpush.msra.mxu0 0.0
  %821 = vmatpush.msra.mxu0 0.0
  %822 = vmatpush.msra.mxu0 0.0
  %823 = vmatpush.msra.mxu0 0.0
  %824 = vmatpush.msra.mxu0 0.0
  %825 = vmatpush.msra.mxu0 0.0
  %826 = vmatpush.msra.mxu0 0.0
  %827 = vmatpush.msra.mxu0 0.0
  %828 = vmatpush.msra.mxu0 0.0
  %829 = vmatpush.msra.mxu0 0.0
  %830 = vmatpush.msra.mxu0 %v805
  %831 = vmatpush.msra.mxu0 %v803
  %832 = vmatpush.msra.mxu0 %v801
  %833 = vmatpush.msra.mxu0 %v799
  %834 = vmatmul.f32.gmra.mxu0 %v88
  %v835 = vpop.f32.mrf.mxu0
  %v836 = vadd.f32 0.0, %v835
  %837 = vmatmul.f32.gmra.mxu0 %v91
  %v838 = vpop.f32.mrf.mxu0
  %v839 = vadd.f32 0.0, %v838
  %840 = vmatmul.f32.gmra.mxu0 %v94
  %v841 = vpop.f32.mrf.mxu0
  %v842 = vadd.f32 0.0, %v841
  %843 = vmatmul.f32.gmra.mxu0 %v97
  %v844 = vpop.f32.mrf.mxu0
  %v845 = vadd.f32 0.0, %v844
  %846 = vdwg.mxu0
  %v847 = vmul.f32 %v836, 0.001953125
  %v848 = vmul.f32 %v839, 0.001953125
  %v849 = vmul.f32 %v842, 0.001953125
  %v850 = vmul.f32 %v845, 0.001953125
  %851 = vmatpush.msra.mxu0 0.0
  %852 = vmatpush.msra.mxu0 0.0
  %853 = vmatpush.msra.mxu0 0.0
  %854 = vmatpush.msra.mxu0 0.0
  %855 = vmatpush.msra.mxu0 0.0
  %856 = vmatpush.msra.mxu0 0.0
  %857 = vmatpush.msra.mxu0 0.0
  %858 = vmatpush.msra.mxu0 0.0
  %859 = vmatpush.msra.mxu0 0.0
  %860 = vmatpush.msra.mxu0 0.0
  %861 = vmatpush.msra.mxu0 0.0
  %862 = vmatpush.msra.mxu0 0.0
  %863 = vmatpush.msra.mxu0 %v817
  %864 = vmatpush.msra.mxu0 %v815
  %865 = vmatpush.msra.mxu0 %v813
  %866 = vmatpush.msra.mxu0 %v811
  %867 = vmatmul.f32.gmra.mxu0 %v88
  %v868 = vpop.f32.mrf.mxu0
  %v869 = vadd.f32 0.0, %v868
  %870 = vmatmul.f32.gmra.mxu0 %v91
  %v871 = vpop.f32.mrf.mxu0
  %v872 = vadd.f32 0.0, %v871
  %873 = vmatmul.f32.gmra.mxu0 %v94
  %v874 = vpop.f32.mrf.mxu0
  %v875 = vadd.f32 0.0, %v874
  %876 = vmatmul.f32.gmra.mxu0 %v97
  %v877 = vpop.f32.mrf.mxu0
  %v878 = vadd.f32 0.0, %v877
  %879 = vdwg.mxu0
  %v880 = vmul.f32 %v869, 0.001953125
  %v881 = vmul.f32 %v872, 0.001953125
  %v882 = vmul.f32 %v875, 0.001953125
  %v883 = vmul.f32 %v878, 0.001953125
  %v884 = vmul.f32 %v847, %v847
  %v885 = vmul.f32 %v848, %v848
  %v886 = vmul.f32 %v849, %v849
  %v887 = vmul.f32 %v850, %v850
  %v888 = vsub.f32 %v880, %v884
  %v889 = vsub.f32 %v881, %v885
  %v890 = vsub.f32 %v882, %v886
  %v891 = vsub.f32 %v883, %v887
  %v892 = vmax.f32 %v888, 0.0
  %v893 = vmax.f32 %v889, 0.0
  %v894 = vmax.f32 %v890, 0.0
  %v895 = vmax.f32 %v891, 0.0
  %v896 = vadd.f32 %v892, 1e-05
  %v897 = vadd.f32 %v893, 1e-05
  %v898 = vadd.f32 %v894, 1e-05
  %v899 = vadd.f32 %v895, 1e-05
  %v900 = vrsqrt.pop %v896
  %v901 = vmul.f32 %v900, %v896
  %v902 = vmul.f32 %v901, %v900
  %v903 = vmul.f32 0.5, %v902
  %v904 = vsub.f32 1.5, %v903
  %v905 = vmul.f32 %v900, %v904
  %vm906 = vweird.f32 %v896
  %vm907 = vweird.f32 %v900
  %vm908 = vmor %vm906, %vm907
  %v909 = vsel %vm908, %v900, %v905
  %v910 = vrsqrt.pop %v897
  %v911 = vmul.f32 %v910, %v897
  %v912 = vmul.f32 %v911, %v910
  %v913 = vmul.f32 0.5, %v912
  %v914 = vsub.f32 1.5, %v913
  %v915 = vmul.f32 %v910, %v914
  %vm916 = vweird.f32 %v897
  %vm917 = vweird.f32 %v910
  %vm918 = vmor %vm916, %vm917
  %v919 = vsel %vm918, %v910, %v915
  %v920 = vrsqrt.pop %v898
  %v921 = vmul.f32 %v920, %v898
  %v922 = vmul.f32 %v921, %v920
  %v923 = vmul.f32 0.5, %v922
  %v924 = vsub.f32 1.5, %v923
  %v925 = vmul.f32 %v920, %v924
  %vm926 = vweird.f32 %v898
  %vm927 = vweird.f32 %v920
  %vm928 = vmor %vm926, %vm927
  %v929 = vsel %vm928, %v920, %v925
  %v930 = vrsqrt.pop %v899
  %v931 = vmul.f32 %v930, %v899
  %v932 = vmul.f32 %v931, %v930
  %v933 = vmul.f32 0.5, %v932
  %v934 = vsub.f32 1.5, %v933
  %v935 = vmul.f32 %v930, %v934
  %vm936 = vweird.f32 %v899
  %vm937 = vweird.f32 %v930
  %vm938 = vmor %vm936, %vm937
  %v939 = vsel %vm938, %v930, %v935
  %v940 = vmul.f32 %v790, %v909
  %v941 = vmul.f32 %v791, %v919
  %v942 = vmul.f32 %v792, %v929
  %v943 = vmul.f32 %v793, %v939
  %v944 = vmul.f32 %v847, %v940
  %v945 = vmul.f32 %v848, %v941
  %v946 = vmul.f32 %v849, %v942
  %v947 = vmul.f32 %v850, %v943
  %v948 = vsub.f32 %v794, %v944
  %v949 = vsub.f32 %v795, %v945
  %v950 = vsub.f32 %v796, %v946
  %v951 = vsub.f32 %v797, %v947
  %952 = vadd.xlane.f32.xlu0 %v779
  %v953 = vpop.xlane.xlu0 %952
  %954 = vadd.xlane.f32.xlu0 %v782
  %v955 = vpop.xlane.xlu0 %954
  %956 = vadd.xlane.f32.xlu0 %v785
  %v957 = vpop.xlane.xlu0 %956
  %958 = vadd.xlane.f32.xlu0 %v788
  %v959 = vpop.xlane.xlu0 %958
  %v960 = vmul.f32 %v779, %v779
  %v961 = vmul.f32 %v782, %v782
  %v962 = vmul.f32 %v785, %v785
  %v963 = vmul.f32 %v788, %v788
  %964 = vadd.xlane.f32.xlu0 %v960
  %v965 = vpop.xlane.xlu0 %964
  %966 = vadd.xlane.f32.xlu0 %v961
  %v967 = vpop.xlane.xlu0 %966
  %968 = vadd.xlane.f32.xlu0 %v962
  %v969 = vpop.xlane.xlu0 %968
  %970 = vadd.xlane.f32.xlu0 %v963
  %v971 = vpop.xlane.xlu0 %970
  %972 = vmatpush.msra.mxu0 0.0
  %973 = vmatpush.msra.mxu0 0.0
  %974 = vmatpush.msra.mxu0 0.0
  %975 = vmatpush.msra.mxu0 0.0
  %976 = vmatpush.msra.mxu0 0.0
  %977 = vmatpush.msra.mxu0 0.0
  %978 = vmatpush.msra.mxu0 0.0
  %979 = vmatpush.msra.mxu0 0.0
  %980 = vmatpush.msra.mxu0 0.0
  %981 = vmatpush.msra.mxu0 0.0
  %982 = vmatpush.msra.mxu0 0.0
  %983 = vmatpush.msra.mxu0 0.0
  %984 = vmatpush.msra.mxu0 %v959
  %985 = vmatpush.msra.mxu0 %v957
  %986 = vmatpush.msra.mxu0 %v955
  %987 = vmatpush.msra.mxu0 %v953
  %988 = vmatmul.f32.gmra.mxu0 %v88
  %v989 = vpop.f32.mrf.mxu0
  %v990 = vadd.f32 0.0, %v989
  %991 = vmatmul.f32.gmra.mxu0 %v91
  %v992 = vpop.f32.mrf.mxu0
  %v993 = vadd.f32 0.0, %v992
  %994 = vmatmul.f32.gmra.mxu0 %v94
  %v995 = vpop.f32.mrf.mxu0
  %v996 = vadd.f32 0.0, %v995
  %997 = vmatmul.f32.gmra.mxu0 %v97
  %v998 = vpop.f32.mrf.mxu0
  %v999 = vadd.f32 0.0, %v998
  %1000 = vdwg.mxu0
  %v1001 = vmul.f32 %v990, 0.001953125
  %v1002 = vmul.f32 %v993, 0.001953125
  %v1003 = vmul.f32 %v996, 0.001953125
  %v1004 = vmul.f32 %v999, 0.001953125
  %1005 = vmatpush.msra.mxu0 0.0
  %1006 = vmatpush.msra.mxu0 0.0
  %1007 = vmatpush.msra.mxu0 0.0
  %1008 = vmatpush.msra.mxu0 0.0
  %1009 = vmatpush.msra.mxu0 0.0
  %1010 = vmatpush.msra.mxu0 0.0
  %1011 = vmatpush.msra.mxu0 0.0
  %1012 = vmatpush.msra.mxu0 0.0
  %1013 = vmatpush.msra.mxu0 0.0
  %1014 = vmatpush.msra.mxu0 0.0
  %1015 = vmatpush.msra.mxu0 0.0
  %1016 = vmatpush.msra.mxu0 0.0
  %1017 = vmatpush.msra.mxu0 %v971
  %1018 = vmatpush.msra.mxu0 %v969
  %1019 = vmatpush.msra.mxu0 %v967
  %1020 = vmatpush.msra.mxu0 %v965
  %1021 = vmatmul.f32.gmra.mxu0 %v88
  %v1022 = vpop.f32.mrf.mxu0
  %v1023 = vadd.f32 0.0, %v1022
  %1024 = vmatmul.f32.gmra.mxu0 %v91
  %v1025 = vpop.f32.mrf.mxu0
  %v1026 = vadd.f32 0.0, %v1025
  %1027 = vmatmul.f32.gmra.mxu0 %v94
  %v1028 = vpop.f32.mrf.mxu0
  %v1029 = vadd.f32 0.0, %v1028
  %1030 = vmatmul.f32.gmra.mxu0 %v97
  %v1031 = vpop.f32.mrf.mxu0
  %v1032 = vadd.f32 0.0, %v1031
  %1033 = vdwg.mxu0
  %v1034 = vmul.f32 %v1023, 0.001953125
  %v1035 = vmul.f32 %v1026, 0.001953125
  %v1036 = vmul.f32 %v1029, 0.001953125
  %v1037 = vmul.f32 %v1032, 0.001953125
  %v1038 = vmul.f32 %v1001, %v1001
  %v1039 = vmul.f32 %v1002, %v1002
  %v1040 = vmul.f32 %v1003, %v1003
  %v1041 = vmul.f32 %v1004, %v1004
  %v1042 = vsub.f32 %v1034, %v1038
  %v1043 = vsub.f32 %v1035, %v1039
  %v1044 = vsub.f32 %v1036, %v1040
  %v1045 = vsub.f32 %v1037, %v1041
  %v1046 = vmax.f32 %v1042, 0.0
  %v1047 = vmax.f32 %v1043, 0.0
  %v1048 = vmax.f32 %v1044, 0.0
  %v1049 = vmax.f32 %v1045, 0.0
  %v1050 = vadd.f32 %v1046, 1e-05
  %v1051 = vadd.f32 %v1047, 1e-05
  %v1052 = vadd.f32 %v1048, 1e-05
  %v1053 = vadd.f32 %v1049, 1e-05
  %v1054 = vrsqrt.pop %v1050
  %v1055 = vmul.f32 %v1054, %v1050
  %v1056 = vmul.f32 %v1055, %v1054
  %v1057 = vmul.f32 0.5, %v1056
  %v1058 = vsub.f32 1.5, %v1057
  %v1059 = vmul.f32 %v1054, %v1058
  %vm1060 = vweird.f32 %v1050
  %vm1061 = vweird.f32 %v1054
  %vm1062 = vmor %vm1060, %vm1061
  %v1063 = vsel %vm1062, %v1054, %v1059
  %v1064 = vrsqrt.pop %v1051
  %v1065 = vmul.f32 %v1064, %v1051
  %v1066 = vmul.f32 %v1065, %v1064
  %v1067 = vmul.f32 0.5, %v1066
  %v1068 = vsub.f32 1.5, %v1067
  %v1069 = vmul.f32 %v1064, %v1068
  %vm1070 = vweird.f32 %v1051
  %vm1071 = vweird.f32 %v1064
  %vm1072 = vmor %vm1070, %vm1071
  %v1073 = vsel %vm1072, %v1064, %v1069
  %v1074 = vrsqrt.pop %v1052
  %v1075 = vmul.f32 %v1074, %v1052
  %v1076 = vmul.f32 %v1075, %v1074
  %v1077 = vmul.f32 0.5, %v1076
  %v1078 = vsub.f32 1.5, %v1077
  %v1079 = vmul.f32 %v1074, %v1078
  %vm1080 = vweird.f32 %v1052
  %vm1081 = vweird.f32 %v1074
  %vm1082 = vmor %vm1080, %vm1081
  %v1083 = vsel %vm1082, %v1074, %v1079
  %v1084 = vrsqrt.pop %v1053
  %v1085 = vmul.f32 %v1084, %v1053
  %v1086 = vmul.f32 %v1085, %v1084
  %v1087 = vmul.f32 0.5, %v1086
  %v1088 = vsub.f32 1.5, %v1087
  %v1089 = vmul.f32 %v1084, %v1088
  %vm1090 = vweird.f32 %v1053
  %vm1091 = vweird.f32 %v1084
  %vm1092 = vmor %vm1090, %vm1091
  %v1093 = vsel %vm1092, %v1084, %v1089
  %v1094 = vmul.f32 %v790, %v1063
  %v1095 = vmul.f32 %v791, %v1073
  %v1096 = vmul.f32 %v792, %v1083
  %v1097 = vmul.f32 %v793, %v1093
  %v1098 = vmul.f32 %v1001, %v1094
  %v1099 = vmul.f32 %v1002, %v1095
  %v1100 = vmul.f32 %v1003, %v1096
  %v1101 = vmul.f32 %v1004, %v1097
  %v1102 = vsub.f32 %v794, %v1098
  %v1103 = vsub.f32 %v795, %v1099
  %v1104 = vsub.f32 %v796, %v1100
  %v1105 = vsub.f32 %v797, %v1101
  %1107 = vset.pattern.permute.xlu0 0
  %1108 = vperm.xlu0 %1107, %v940
  %v1109 = vpop.permute.xlu0 %1108
  %1112 = vset.pattern.permute.xlu0 0
  %1113 = vperm.xlu0 %1112, %v941
  %v1114 = vpop.permute.xlu0 %1113
  %1117 = vset.pattern.permute.xlu0 0
  %1118 = vperm.xlu0 %1117, %v942
  %v1119 = vpop.permute.xlu0 %1118
  %1122 = vset.pattern.permute.xlu0 0
  %1123 = vperm.xlu0 %1122, %v943
  %v1124 = vpop.permute.xlu0 %1123
  %1127 = vset.pattern.permute.xlu0 0
  %1128 = vperm.xlu0 %1127, %v1094
  %v1129 = vpop.permute.xlu0 %1128
  %1132 = vset.pattern.permute.xlu0 0
  %1133 = vperm.xlu0 %1132, %v1095
  %v1134 = vpop.permute.xlu0 %1133
  %1137 = vset.pattern.permute.xlu0 0
  %1138 = vperm.xlu0 %1137, %v1096
  %v1139 = vpop.permute.xlu0 %1138
  %1142 = vset.pattern.permute.xlu0 0
  %1143 = vperm.xlu0 %1142, %v1097
  %v1144 = vpop.permute.xlu0 %1143
  %v1146 = vsel %vm56, %v1109, %v1129
  %v1147 = vsel %vm57, %v1109, %v1129
  %v1148 = vsel %vm56, %v1114, %v1134
  %v1149 = vsel %vm57, %v1114, %v1134
  %v1150 = vsel %vm56, %v1119, %v1139
  %v1151 = vsel %vm57, %v1119, %v1139
  %v1152 = vsel %vm56, %v1124, %v1144
  %v1153 = vsel %vm57, %v1124, %v1144
  %1155 = vset.pattern.permute.xlu0 0
  %1156 = vperm.xlu0 %1155, %v948
  %v1157 = vpop.permute.xlu0 %1156
  %1160 = vset.pattern.permute.xlu0 0
  %1161 = vperm.xlu0 %1160, %v949
  %v1162 = vpop.permute.xlu0 %1161
  %1165 = vset.pattern.permute.xlu0 0
  %1166 = vperm.xlu0 %1165, %v950
  %v1167 = vpop.permute.xlu0 %1166
  %1170 = vset.pattern.permute.xlu0 0
  %1171 = vperm.xlu0 %1170, %v951
  %v1172 = vpop.permute.xlu0 %1171
  %1175 = vset.pattern.permute.xlu0 0
  %1176 = vperm.xlu0 %1175, %v1102
  %v1177 = vpop.permute.xlu0 %1176
  %1180 = vset.pattern.permute.xlu0 0
  %1181 = vperm.xlu0 %1180, %v1103
  %v1182 = vpop.permute.xlu0 %1181
  %1185 = vset.pattern.permute.xlu0 0
  %1186 = vperm.xlu0 %1185, %v1104
  %v1187 = vpop.permute.xlu0 %1186
  %1190 = vset.pattern.permute.xlu0 0
  %1191 = vperm.xlu0 %1190, %v1105
  %v1192 = vpop.permute.xlu0 %1191
  %v1194 = vsel %vm56, %v1157, %v1177
  %v1195 = vsel %vm57, %v1157, %v1177
  %v1196 = vsel %vm56, %v1162, %v1182
  %v1197 = vsel %vm57, %v1162, %v1182
  %v1198 = vsel %vm56, %v1167, %v1187
  %v1199 = vsel %vm57, %v1167, %v1187
  %v1200 = vsel %vm56, %v1172, %v1192
  %v1201 = vsel %vm57, %v1172, %v1192
  %v1202 = vmul.f32 %v750, %v1146
  %v1203 = vmul.f32 %v779, %v1147
  %v1204 = vmul.f32 %v753, %v1148
  %v1205 = vmul.f32 %v782, %v1149
  %v1206 = vmul.f32 %v756, %v1150
  %v1207 = vmul.f32 %v785, %v1151
  %v1208 = vmul.f32 %v759, %v1152
  %v1209 = vmul.f32 %v788, %v1153
  %v1210 = vadd.f32 %v1202, %v1194
  %v1211 = vadd.f32 %v1203, %v1195
  %v1212 = vadd.f32 %v1204, %v1196
  %v1213 = vadd.f32 %v1205, %v1197
  %v1214 = vadd.f32 %v1206, %v1198
  %v1215 = vadd.f32 %v1207, %v1199
  %v1216 = vadd.f32 %v1208, %v1200
  %v1217 = vadd.f32 %v1209, %v1201
  %v1218 = vxor.u32 %v1210, 2147483648
  %v1219 = vxor.u32 %v1211, 2147483648
  %v1220 = vxor.u32 %v1212, 2147483648
  %v1221 = vxor.u32 %v1213, 2147483648
  %v1222 = vxor.u32 %v1214, 2147483648
  %v1223 = vxor.u32 %v1215, 2147483648
  %v1224 = vxor.u32 %v1216, 2147483648
  %v1225 = vxor.u32 %v1217, 2147483648
  %v1226 = vmul.f32 %v1218, 1.442695
  %v1227 = vpow.pop %v1226
  %v1228 = vmul.f32 %v1219, 1.442695
  %v1229 = vpow.pop %v1228
  %v1230 = vmul.f32 %v1220, 1.442695
  %v1231 = vpow.pop %v1230
  %v1232 = vmul.f32 %v1221, 1.442695
  %v1233 = vpow.pop %v1232
  %v1234 = vmul.f32 %v1222, 1.442695
  %v1235 = vpow.pop %v1234
  %v1236 = vmul.f32 %v1223, 1.442695
  %v1237 = vpow.pop %v1236
  %v1238 = vmul.f32 %v1224, 1.442695
  %v1239 = vpow.pop %v1238
  %v1240 = vmul.f32 %v1225, 1.442695
  %v1241 = vpow.pop %v1240
  %v1242 = vadd.f32 %v1227, 1.0
  %v1243 = vadd.f32 %v1229, 1.0
  %v1244 = vadd.f32 %v1231, 1.0
  %v1245 = vadd.f32 %v1233, 1.0
  %v1246 = vadd.f32 %v1235, 1.0
  %v1247 = vadd.f32 %v1237, 1.0
  %v1248 = vadd.f32 %v1239, 1.0
  %v1249 = vadd.f32 %v1241, 1.0
  %v1250 = vrcp.pop %v1242
  %v1251 = vmul.f32 %v1242, %v1250
  %v1252 = vsub.f32 1.0, %v1251
  %v1253 = vmul.f32 %v1250, %v1252
  %v1254 = vadd.f32 %v1250, %v1253
  %vm1255 = vweird.f32 %v1242
  %vm1256 = vweird.f32 %v1250
  %vm1257 = vmor %vm1255, %vm1256
  %v1258 = vsel %vm1257, %v1250, %v1254
  %v1259 = vand.u32 2147483647, %v1242
  %vm1260 = vcmp.eq.f32.partialorder %v1259, 8.507059e+37
  %v1261 = vand.u32 %v1242, 2147483648
  %v1262 = vor.u32 1.1754944e-38, %v1261
  %v1263 = vsel %vm1260, %v1262, %v1258
  %v1264 = vmul.f32 1.0, %v1263
  %v1265 = vrcp.pop %v1243
  %v1266 = vmul.f32 %v1243, %v1265
  %v1267 = vsub.f32 1.0, %v1266
  %v1268 = vmul.f32 %v1265, %v1267
  %v1269 = vadd.f32 %v1265, %v1268
  %vm1270 = vweird.f32 %v1243
  %vm1271 = vweird.f32 %v1265
  %vm1272 = vmor %vm1270, %vm1271
  %v1273 = vsel %vm1272, %v1265, %v1269
  %v1274 = vand.u32 2147483647, %v1243
  %vm1275 = vcmp.eq.f32.partialorder %v1274, 8.507059e+37
  %v1276 = vand.u32 %v1243, 2147483648
  %v1277 = vor.u32 1.1754944e-38, %v1276
  %v1278 = vsel %vm1275, %v1277, %v1273
  %v1279 = vmul.f32 1.0, %v1278
  %v1280 = vrcp.pop %v1244
  %v1281 = vmul.f32 %v1244, %v1280
  %v1282 = vsub.f32 1.0, %v1281
  %v1283 = vmul.f32 %v1280, %v1282
  %v1284 = vadd.f32 %v1280, %v1283
  %vm1285 = vweird.f32 %v1244
  %vm1286 = vweird.f32 %v1280
  %vm1287 = vmor %vm1285, %vm1286
  %v1288 = vsel %vm1287, %v1280, %v1284
  %v1289 = vand.u32 2147483647, %v1244
  %vm1290 = vcmp.eq.f32.partialorder %v1289, 8.507059e+37
  %v1291 = vand.u32 %v1244, 2147483648
  %v1292 = vor.u32 1.1754944e-38, %v1291
  %v1293 = vsel %vm1290, %v1292, %v1288
  %v1294 = vmul.f32 1.0, %v1293
  %v1295 = vrcp.pop %v1245
  %v1296 = vmul.f32 %v1245, %v1295
  %v1297 = vsub.f32 1.0, %v1296
  %v1298 = vmul.f32 %v1295, %v1297
  %v1299 = vadd.f32 %v1295, %v1298
  %vm1300 = vweird.f32 %v1245
  %vm1301 = vweird.f32 %v1295
  %vm1302 = vmor %vm1300, %vm1301
  %v1303 = vsel %vm1302, %v1295, %v1299
  %v1304 = vand.u32 2147483647, %v1245
  %vm1305 = vcmp.eq.f32.partialorder %v1304, 8.507059e+37
  %v1306 = vand.u32 %v1245, 2147483648
  %v1307 = vor.u32 1.1754944e-38, %v1306
  %v1308 = vsel %vm1305, %v1307, %v1303
  %v1309 = vmul.f32 1.0, %v1308
  %v1310 = vrcp.pop %v1246
  %v1311 = vmul.f32 %v1246, %v1310
  %v1312 = vsub.f32 1.0, %v1311
  %v1313 = vmul.f32 %v1310, %v1312
  %v1314 = vadd.f32 %v1310, %v1313
  %vm1315 = vweird.f32 %v1246
  %vm1316 = vweird.f32 %v1310
  %vm1317 = vmor %vm1315, %vm1316
  %v1318 = vsel %vm1317, %v1310, %v1314
  %v1319 = vand.u32 2147483647, %v1246
  %vm1320 = vcmp.eq.f32.partialorder %v1319, 8.507059e+37
  %v1321 = vand.u32 %v1246, 2147483648
  %v1322 = vor.u32 1.1754944e-38, %v1321
  %v1323 = vsel %vm1320, %v1322, %v1318
  %v1324 = vmul.f32 1.0, %v1323
  %v1325 = vrcp.pop %v1247
  %v1326 = vmul.f32 %v1247, %v1325
  %v1327 = vsub.f32 1.0, %v1326
  %v1328 = vmul.f32 %v1325, %v1327
  %v1329 = vadd.f32 %v1325, %v1328
  %vm1330 = vweird.f32 %v1247
  %vm1331 = vweird.f32 %v1325
  %vm1332 = vmor %vm1330, %vm1331
  %v1333 = vsel %vm1332, %v1325, %v1329
  %v1334 = vand.u32 2147483647, %v1247
  %vm1335 = vcmp.eq.f32.partialorder %v1334, 8.507059e+37
  %v1336 = vand.u32 %v1247, 2147483648
  %v1337 = vor.u32 1.1754944e-38, %v1336
  %v1338 = vsel %vm1335, %v1337, %v1333
  %v1339 = vmul.f32 1.0, %v1338
  %v1340 = vrcp.pop %v1248
  %v1341 = vmul.f32 %v1248, %v1340
  %v1342 = vsub.f32 1.0, %v1341
  %v1343 = vmul.f32 %v1340, %v1342
  %v1344 = vadd.f32 %v1340, %v1343
  %vm1345 = vweird.f32 %v1248
  %vm1346 = vweird.f32 %v1340
  %vm1347 = vmor %vm1345, %vm1346
  %v1348 = vsel %vm1347, %v1340, %v1344
  %v1349 = vand.u32 2147483647, %v1248
  %vm1350 = vcmp.eq.f32.partialorder %v1349, 8.507059e+37
  %v1351 = vand.u32 %v1248, 2147483648
  %v1352 = vor.u32 1.1754944e-38, %v1351
  %v1353 = vsel %vm1350, %v1352, %v1348
  %v1354 = vmul.f32 1.0, %v1353
  %v1355 = vrcp.pop %v1249
  %v1356 = vmul.f32 %v1249, %v1355
  %v1357 = vsub.f32 1.0, %v1356
  %v1358 = vmul.f32 %v1355, %v1357
  %v1359 = vadd.f32 %v1355, %v1358
  %vm1360 = vweird.f32 %v1249
  %vm1361 = vweird.f32 %v1355
  %vm1362 = vmor %vm1360, %vm1361
  %v1363 = vsel %vm1362, %v1355, %v1359
  %v1364 = vand.u32 2147483647, %v1249
  %vm1365 = vcmp.eq.f32.partialorder %v1364, 8.507059e+37
  %v1366 = vand.u32 %v1249, 2147483648
  %v1367 = vor.u32 1.1754944e-38, %v1366
  %v1368 = vsel %vm1365, %v1367, %v1363
  %v1369 = vmul.f32 1.0, %v1368
  %v1370 = vmul.f32 %v1210, %v1264
  %v1371 = vmul.f32 %v1211, %v1279
  %v1372 = vmul.f32 %v1212, %v1294
  %v1373 = vmul.f32 %v1213, %v1309
  %v1374 = vmul.f32 %v1214, %v1324
  %v1375 = vmul.f32 %v1215, %v1339
  %v1376 = vmul.f32 %v1216, %v1354
  %v1377 = vmul.f32 %v1217, %v1369
  %v1378 = vld [vmem:[%s8] sm:$0xff]
  %v1379 = vld [vmem:[%s8 + $0x8] sm:$0xff]
  %v1380 = vld [vmem:[%s8 + $0x10] sm:$0xff]
  %v1381 = vld [vmem:[%s8 + $0x18] sm:$0xff]
  %1382 = vrot.lane.b32.xlu0 %v1370, 1
  %v1383 = vpop.permute.xlu0 %1382
  %1384 = vrot.lane.b32.xlu0 %v1372, 1
  %v1385 = vpop.permute.xlu0 %1384
  %1386 = vrot.lane.b32.xlu0 %v1374, 1
  %v1387 = vpop.permute.xlu0 %1386
  %1388 = vrot.lane.b32.xlu0 %v1376, 1
  %v1389 = vpop.permute.xlu0 %1388
  %1390 = vrot.lane.b32.xlu0 %v1371, 1
  %v1391 = vpop.permute.xlu0 %1390
  %1392 = vrot.lane.b32.xlu0 %v1373, 1
  %v1393 = vpop.permute.xlu0 %1392
  %1394 = vrot.lane.b32.xlu0 %v1375, 1
  %v1395 = vpop.permute.xlu0 %1394
  %1396 = vrot.lane.b32.xlu0 %v1377, 1
  %v1397 = vpop.permute.xlu0 %1396
  %1398 = vrot.lane.b32.xlu0 %v1370, 127
  %v1399 = vpop.permute.xlu0 %1398
  %1400 = vrot.lane.b32.xlu0 %v1372, 127
  %v1401 = vpop.permute.xlu0 %1400
  %1402 = vrot.lane.b32.xlu0 %v1374, 127
  %v1403 = vpop.permute.xlu0 %1402
  %1404 = vrot.lane.b32.xlu0 %v1376, 127
  %v1405 = vpop.permute.xlu0 %1404
  %1406 = vrot.lane.b32.xlu0 %v1371, 127
  %v1407 = vpop.permute.xlu0 %1406
  %1408 = vrot.lane.b32.xlu0 %v1373, 127
  %v1409 = vpop.permute.xlu0 %1408
  %1410 = vrot.lane.b32.xlu0 %v1375, 127
  %v1411 = vpop.permute.xlu0 %1410
  %1412 = vrot.lane.b32.xlu0 %v1377, 127
  %v1413 = vpop.permute.xlu0 %1412
  %v1414 = vsel %vm52, 0.0, %v1383
  %v1415 = vsel %vm53, 0.0, %v1391
  %v1416 = vsel %vm52, 0.0, %v1385
  %v1417 = vsel %vm53, 0.0, %v1393
  %v1418 = vsel %vm52, 0.0, %v1387
  %v1419 = vsel %vm53, 0.0, %v1395
  %v1420 = vsel %vm52, 0.0, %v1389
  %v1421 = vsel %vm53, 0.0, %v1397
  %v1422 = vsel %vm54, 0.0, %v1399
  %v1423 = vsel %vm55, 0.0, %v1407
  %v1424 = vsel %vm54, 0.0, %v1401
  %v1425 = vsel %vm55, 0.0, %v1409
  %v1426 = vsel %vm54, 0.0, %v1403
  %v1427 = vsel %vm55, 0.0, %v1411
  %v1428 = vsel %vm54, 0.0, %v1405
  %v1429 = vsel %vm55, 0.0, %v1413
  %v1430 = vld [vmem:[%s9] sm:$0xff]
  %v1431 = vld [vmem:[%s9 + $0x8] sm:$0xff]
  %v1432 = vld [vmem:[%s9 + $0x10] sm:$0xff]
  %v1433 = vld [vmem:[%s9 + $0x18] sm:$0xff]
  %1435 = vset.pattern.permute.xlu0 0
  %1436 = vperm.xlu0 %1435, %v1430
  %v1437 = vpop.permute.xlu0 %1436
  %1440 = vset.pattern.permute.xlu0 0
  %1441 = vperm.xlu0 %1440, %v1431
  %v1442 = vpop.permute.xlu0 %1441
  %1445 = vset.pattern.permute.xlu0 0
  %1446 = vperm.xlu0 %1445, %v1432
  %v1447 = vpop.permute.xlu0 %1446
  %1450 = vset.pattern.permute.xlu0 0
  %1451 = vperm.xlu0 %1450, %v1433
  %v1452 = vpop.permute.xlu0 %1451
  %v1455 = vsel %vm719, %v1378, 0
  %v1458 = vsel %vm719, %v1379, 0
  %v1461 = vsel %vm719, %v1380, 0
  %v1464 = vsel %vm719, %v1381, 0
  %1466 = vmatpush.msra.mxu0 0.0
  %1467 = vmatpush.msra.mxu0 0.0
  %1468 = vmatpush.msra.mxu0 0.0
  %1469 = vmatpush.msra.mxu0 0.0
  %1470 = vmatpush.msra.mxu0 %v1428
  %1471 = vmatpush.msra.mxu0 %v1426
  %1472 = vmatpush.msra.mxu0 %v1424
  %1473 = vmatpush.msra.mxu0 %v1422
  %1474 = vmatpush.msra.mxu0 %v1376
  %1475 = vmatpush.msra.mxu0 %v1374
  %1476 = vmatpush.msra.mxu0 %v1372
  %1477 = vmatpush.msra.mxu0 %v1370
  %1478 = vmatpush.msra.mxu0 %v1420
  %1479 = vmatpush.msra.mxu0 %v1418
  %1480 = vmatpush.msra.mxu0 %v1416
  %1481 = vmatpush.msra.mxu0 %v1414
  %1482 = vmatmul.f32.gmra.mxu0 %v1455
  %v1483 = vpop.f32.mrf.mxu0
  %v1484 = vadd.f32 %v1437, %v1483
  %1485 = vmatmul.f32.gmra.mxu0 %v1458
  %v1486 = vpop.f32.mrf.mxu0
  %v1487 = vadd.f32 %v1442, %v1486
  %1488 = vmatmul.f32.gmra.mxu0 %v1461
  %v1489 = vpop.f32.mrf.mxu0
  %v1490 = vadd.f32 %v1447, %v1489
  %1491 = vmatmul.f32.gmra.mxu0 %v1464
  %v1492 = vpop.f32.mrf.mxu0
  %v1493 = vadd.f32 %v1452, %v1492
  %1494 = vdwg.mxu0
  %1495 = vmatpush.msra.mxu0 0.0
  %1496 = vmatpush.msra.mxu0 0.0
  %1497 = vmatpush.msra.mxu0 0.0
  %1498 = vmatpush.msra.mxu0 0.0
  %1499 = vmatpush.msra.mxu0 %v1429
  %1500 = vmatpush.msra.mxu0 %v1427
  %1501 = vmatpush.msra.mxu0 %v1425
  %1502 = vmatpush.msra.mxu0 %v1423
  %1503 = vmatpush.msra.mxu0 %v1377
  %1504 = vmatpush.msra.mxu0 %v1375
  %1505 = vmatpush.msra.mxu0 %v1373
  %1506 = vmatpush.msra.mxu0 %v1371
  %1507 = vmatpush.msra.mxu0 %v1421
  %1508 = vmatpush.msra.mxu0 %v1419
  %1509 = vmatpush.msra.mxu0 %v1417
  %1510 = vmatpush.msra.mxu0 %v1415
  %1511 = vmatmul.f32.gmra.mxu0 %v1455
  %v1512 = vpop.f32.mrf.mxu0
  %v1513 = vadd.f32 %v1437, %v1512
  %1514 = vmatmul.f32.gmra.mxu0 %v1458
  %v1515 = vpop.f32.mrf.mxu0
  %v1516 = vadd.f32 %v1442, %v1515
  %1517 = vmatmul.f32.gmra.mxu0 %v1461
  %v1518 = vpop.f32.mrf.mxu0
  %v1519 = vadd.f32 %v1447, %v1518
  %1520 = vmatmul.f32.gmra.mxu0 %v1464
  %v1521 = vpop.f32.mrf.mxu0
  %v1522 = vadd.f32 %v1452, %v1521
  %1523 = vdwg.mxu0
  %v1524 = vadd.f32 %v35, %v1484
  %v1525 = vadd.f32 %v36, %v1513
  %v1526 = vadd.f32 %v37, %v1487
  %v1527 = vadd.f32 %v38, %v1516
  %v1528 = vadd.f32 %v39, %v1490
  %v1529 = vadd.f32 %v40, %v1519
  %v1530 = vadd.f32 %v41, %v1493
  %v1531 = vadd.f32 %v42, %v1522
  %1532 = vst [vmem:[%s10] sm:$0xff] %v1524
  %1533 = vst [vmem:[%s10 + $0x8] sm:$0xff] %v1525
  %1534 = vst [vmem:[%s10 + $0x10] sm:$0xff] %v1526
  %1535 = vst [vmem:[%s10 + $0x18] sm:$0xff] %v1527
  %1536 = vst [vmem:[%s10 + $0x20] sm:$0xff] %v1528
  %1537 = vst [vmem:[%s10 + $0x28] sm:$0xff] %v1529
  %1538 = vst [vmem:[%s10 + $0x30] sm:$0xff] %v1530
  %1539 = vst [vmem:[%s10 + $0x38] sm:$0xff] %v1531
  // Predicated region
  $region42: #{resblock.1} parent=0 // pred_check
    _
  $region43: #{resblock.1} parent=0 // pred_check_branch
    %1541 = sbr.rel (0) target = $region45
  $region44: #{resblock.1} parent=0 // pred_region
    _
  $region45: #{resblock.1} parent=0 // pred_fallthru
    _
  // Predicated region
  $region46: #{resblock.1} parent=0 // pred_check
    _
  $region47: #{resblock.1} parent=0 // pred_check_branch
    %1543 = sbr.rel (0) target = $region49
  $region48: #{resblock.1} parent=0 // pred_region
    _
  $region49: #{resblock.1} parent=0 // pred_fallthru
    _

</llo_original>
